<compile_context>
chip_gen: v6e
topology: v6e:2x2x1
jax: 0.10.0
libtpu: 0.0.40
codegen_flags: <defaults>
</compile_context>

<pallas_src>
import functools

import jax
import jax.numpy as jnp
from jax import lax
from jax.experimental import pallas as pl
from jax.experimental.pallas import tpu as pltpu

EPSILON = 1e-4

# Per-block byte cap / scoped VMEM limit, chosen per TPU generation.
_SMALL_VMEM_BLOCK_BYTES = 2 * 1024 * 1024      # v7x-style parts (64 MiB physical)
_SMALL_VMEM_LIMIT_BYTES = 48 * 1024 * 1024
_LARGE_VMEM_BLOCK_BYTES = 6 * 1024 * 1024      # v5e / v6e (128 MiB physical)
_LARGE_VMEM_LIMIT_BYTES = 104 * 1024 * 1024


@functools.lru_cache(maxsize=None)
def _vmem_budget():
    """Returns (per-block byte cap, vmem_limit_bytes) for the local TPU."""
    try:
        vmem_bytes = pltpu.get_tpu_info().vmem_capacity_bytes
    except Exception:  # query unavailable -> assume the smallest (v7x-like) VMEM
        vmem_bytes = 64 * 1024 * 1024
    if vmem_bytes >= 100 * 1024 * 1024:
        return _LARGE_VMEM_BLOCK_BYTES, _LARGE_VMEM_LIMIT_BYTES
    return _SMALL_VMEM_BLOCK_BYTES, _SMALL_VMEM_LIMIT_BYTES


def _largest_divisor_leq(n, k):
    k = max(1, min(k, n))
    for d in range(k, 0, -1):
        if n % d == 0:
            return d
    return 1


def _choose_n_tile(n, plane_bytes, max_block_bytes):
    """Channels (B*C planes) per grid step for the natural (N, H, W) layout."""
    cap = max(1, max_block_bytes // plane_bytes)  # clamps to 1 full plane (TODO halo tiling)
    if n > 1:
        cap = min(cap, pl.cdiv(n, 2))             # >= 2 grid steps -> both v7x TCs busy
    cap = min(cap, n)
    nt = _largest_divisor_leq(n, cap)
    if nt < max(1, cap // 2):                     # no decent divisor (e.g. prime n):
        nt = cap                                  # accept a ragged (masked) final block
    return nt


def _choose_lane_tile(n, plane_bytes, max_block_bytes):
    """Lane-dense channel tile for the channel-last layout, or None if not viable."""
    if n % 128 != 0 or 128 * plane_bytes > max_block_bytes:
        return None                               # the base tile itself busts the budget
    nt = 128
    while (n % (2 * nt) == 0
           and 2 * nt * plane_bytes <= max_block_bytes
           and n // (2 * nt) >= 2):
        nt *= 2
    if n // nt < 2:                               # a 1-step grid would idle a v7x TC
        return None
    return nt


def _sobel_kernel(x_ref, o_ref, *, epsilon, h_axis, w_axis, w_matmul):
    """One block: 3x3 avg pool (zero pad) -> Sobel x/y (zero pad) -> magnitude.

    Every block carries the full (H, W) plane of its channels, so both
    zero-padded stages match the PyTorch cascade exactly at the image border.
    `h_axis` / `w_axis` locate H / W inside the block: axis 0 is the non-vreg
    leading axis (slice shifts); sublane / lane axes use XLU rotates.
    """
    x = x_ref[...].astype(jnp.float32)
    shape = x.shape
    W = shape[w_axis]

    def make_shift(axis):
        # shift(a, d)[..., i, ...] = a[..., i + d, ...], zero outside the block.
        if axis == 0:
            def shift(a, d):
                zero = jnp.zeros_like(a[0:1])
                if d > 0:
                    return jnp.concatenate([a[1:], zero], axis=0)
                return jnp.concatenate([zero, a[:-1]], axis=0)
            return shift

        n = shape[axis]
        mshape = [1] * len(shape)
        mshape[axis] = n
        idx = lax.broadcasted_iota(jnp.int32, tuple(mshape), axis)
        masks = {+1: idx < n - 1, -1: idx >= 1}   # low-rank boundary masks, reused

        def shift(a, d):
            rolled = pltpu.roll(a, (-d) % n, axis=axis)   # XLU sublane/lane rotate
            return jnp.where(masks[d], rolled, 0.0)
        return shift

    sh = make_shift(h_axis)

    if w_matmul:
        # Lane-unfriendly W (not a multiple of 128): do the W-axis 1-D stencils
        # as banded-matrix matmuls on the MXU (idle in this memory-bound
        # kernel).  The band matrices bake in the zero padding exactly.
        wi = lax.broadcasted_iota(jnp.int32, (W, W), 0)   # input column  w
        wj = lax.broadcasted_iota(jnp.int32, (W, W), 1)   # output column w'
        diff = wj - wi
        t_box = jnp.where(jnp.abs(diff) <= 1, 1.0, 0.0)                          # [1, 1, 1]
        t_dx = jnp.where(diff == 1, 1.0, 0.0) - jnp.where(diff == -1, 1.0, 0.0)  # [1, 0,-1]
        t_dy = jnp.where(jnp.abs(diff) == 1, 1.0, 0.0) + jnp.where(diff == 0, 2.0, 0.0)  # [1,2,1]

        lead = shape[0] * shape[1]                # natural layout only: (NT, H, W)

        def wpass(a, t):
            y = jnp.dot(a.reshape(lead, W), t,
                        preferred_element_type=jnp.float32,
                        precision=jax.lax.Precision.HIGHEST)
            return y.reshape(shape)

        row = wpass(x, t_box)
        pooled = (sh(row, -1) + row + sh(row, +1)) * (1.0 / 9.0)
        hx = wpass(pooled, t_dx)                  # [1, 0, -1] along W
        hy = wpass(pooled, t_dy)                  # [1, 2, 1]  along W
    else:
        sw = make_shift(w_axis)
        row = sw(x, -1) + x + sw(x, +1)
        pooled = (sh(row, -1) + row + sh(row, +1)) * (1.0 / 9.0)
        pm1 = sw(pooled, -1)                      # hoisted: shared by hx and hy
        pp1 = sw(pooled, +1)
        hx = pm1 - pp1                            # [1, 0, -1] along W
        hy = pm1 + 2.0 * pooled + pp1             # [1, 2, 1]  along W

    gx = (sh(hx, -1) + 2.0 * hx + sh(hx, +1)) * 0.25    # [1, 2, 1]  along H
    gy = (sh(hy, -1) - sh(hy, +1)) * 0.25               # [1, 0, -1] along H

    o_ref[...] = jnp.sqrt(gx * gx + gy * gy + epsilon).astype(o_ref.dtype)


def sobel_operator(x, epsilon=EPSILON):
    """x: (B, C, H, W) -> (B, C, H, W); matches SobelOperator.forward."""
    b, c, h, w = x.shape
    n = b * c
    out_dtype = x.dtype if jnp.issubdtype(x.dtype, jnp.floating) else jnp.float32

    max_block_bytes, vmem_limit = _vmem_budget()
    plane_bytes = h * w * 4                       # f32 temporaries dominate VMEM

    x_nhw = x.reshape(n, h, w)                    # free: merges leading dims only

    # Layout decision (lane-dense stores vs. extra HBM transpose passes).
    lane_tile = None
    if w < 128:
        lane_tile = _choose_lane_tile(n, plane_bytes, max_block_bytes)

    compiler_params = pltpu.CompilerParams(
        dimension_semantics=("parallel",),
        vmem_limit_bytes=vmem_limit,
    )

    if lane_tile is not None:
        # Channel-last: lanes = B*C (dense, unmasked stores); H leading, W sublane.
        nt = lane_tile
        x_cl = jnp.transpose(x_nhw, (1, 2, 0))
        kernel = functools.partial(
            _sobel_kernel, epsilon=float(epsilon), h_axis=0, w_axis=1, w_matmul=False)
        out_cl = pl.pallas_call(
            kernel,
            out_shape=jax.ShapeDtypeStruct((h, w, n), out_dtype),
            grid_spec=pltpu.PrefetchScalarGridSpec(
                num_scalar_prefetch=0,
                grid=(n // nt,),
                in_specs=[pl.BlockSpec((h, w, nt), lambda i: (0, 0, i))],
                out_specs=pl.BlockSpec((h, w, nt), lambda i: (0, 0, i)),
            ),
            compiler_params=compiler_params,
        )(x_cl)
        out = jnp.transpose(out_cl, (2, 0, 1))
    else:
        # Natural layout: no HBM transposes.  lanes = W, sublanes = H.
        # Use the MXU banded W-pass when W is not a multiple of 128 (bounded so
        # the (W, W) band matrices stay small); lane-aligned W uses XLU rotates.
        w_matmul = (w % 128 != 0) and (w <= 1024)
        budget = max_block_bytes - (3 * w * w * 4 if w_matmul else 0)
        budget = max(budget, plane_bytes)
        nt = _choose_n_tile(n, plane_bytes, budget)
        kernel = functools.partial(
            _sobel_kernel, epsilon=float(epsilon), h_axis=1, w_axis=2, w_matmul=w_matmul)
        out = pl.pallas_call(
            kernel,
            out_shape=jax.ShapeDtypeStruct((n, h, w), out_dtype),
            grid_spec=pltpu.PrefetchScalarGridSpec(
                num_scalar_prefetch=0,
                grid=(pl.cdiv(n, nt),),
                in_specs=[pl.BlockSpec((nt, h, w), lambda i: (i, 0, 0))],
                out_specs=pl.BlockSpec((nt, h, w), lambda i: (i, 0, 0)),
            ),
            compiler_params=compiler_params,
        )(x_nhw)

    return out.reshape(b, c, h, w)


def _reference(x, epsilon=EPSILON):
    """Plain-JAX reference (matches the PyTorch module) for sanity checking."""
    b, c, h, w = x.shape
    xf = x.astype(jnp.float32).reshape(b * c, 1, h, w)

    def conv(img, k):
        return jax.lax.conv_general_dilated(
            img, k[None, None, :, :], window_strides=(1, 1),
            padding=((1, 1), (1, 1)),
            dimension_numbers=("NCHW", "OIHW", "NCHW"))

    avg_k = jnp.ones((3, 3), jnp.float32) / 9.0
    xk = jnp.array([[1, 0, -1], [2, 0, -2], [1, 0, -1]], jnp.float32) / 4.0
    yk = jnp.array([[1, 2, 1], [0, 0, 0], [-1, -2, -1]], jnp.float32) / 4.0
    pooled = conv(xf, avg_k)
    gx = conv(pooled, xk)
    gy = conv(pooled, yk)
    return jnp.sqrt(gx ** 2 + gy ** 2 + epsilon).reshape(b, c, h, w)


if __name__ == "__main__":
    root = jax.random.PRNGKey(0)
    k1, k2, k3 = jax.random.split(root, 3)

    # Required small shape: W < 128, B*C not lane-friendly
    #   -> natural layout + MXU banded W-pass, 2 "parallel" grid steps.
    x1 = jax.random.normal(k1, (2, 4, 16, 16), dtype=jnp.float32)
    out1 = jax.block_until_ready(sobel_operator(x1, EPSILON))
    ref1 = _reference(x1, EPSILON)
    assert out1.shape == (2, 4, 16, 16)
    assert jnp.allclose(out1, ref1, atol=1e-4, rtol=1e-4), float(
        jnp.max(jnp.abs(out1 - ref1)))

    # W < 128 but B*C a multiple of 128 -> lane-dense channel-last path.
    x2 = jax.random.normal(k2, (2, 128, 16, 16), dtype=jnp.float32)
    out2 = jax.block_until_ready(sobel_operator(x2, EPSILON))
    ref2 = _reference(x2, EPSILON)
    assert jnp.allclose(out2, ref2, atol=1e-4, rtol=1e-4), float(
        jnp.max(jnp.abs(out2 - ref2)))

    # Lane-aligned W -> natural layout with XLU lane rotates for the W taps.
    x3 = jax.random.normal(k3, (1, 4, 16, 128), dtype=jnp.float32)
    out3 = jax.block_until_ready(sobel_operator(x3, EPSILON))
    ref3 = _reference(x3, EPSILON)
    assert jnp.allclose(out3, ref3, atol=1e-4, rtol=1e-4), float(
        jnp.max(jnp.abs(out3 - ref3)))

    print("KERNEL_OK")
</pallas_src>

<mosaic_0001>
module attributes {stable_mosaic.version = 11 : i64} {
  func.func @_sobel_kernel(%arg0: i32, %arg1: memref<4x16x16xf32, #tpu.memory_space<vmem>>, %arg2: memref<4x16x16xf32, #tpu.memory_space<vmem>>) attributes {dimension_semantics = [#tpu.dimension_semantics<parallel>], iteration_bounds = array<i64: 2>, scalar_prefetch = 0 : i64, scratch_operands = 0 : i64, tpu.core_type = #tpu.core_type<tc>, window_params = [{transform_indices = @transform_0, window_bounds = array<i64: 4, 16, 16>}, {transform_indices = @transform_1, window_bounds = array<i64: 4, 16, 16>}]} {
    %c0 = arith.constant 0 : index
    %c0_0 = arith.constant 0 : index
    %c0_1 = arith.constant 0 : index
    %0 = vector.load %arg1[%c0, %c0_0, %c0_1] : memref<4x16x16xf32, #tpu.memory_space<vmem>>, vector<4x16x16xf32>
    %1 = tpu.iota {dimensions = array<i32: 1>} : vector<1x16x1xi32>
    %c15_i32 = arith.constant 15 : i32
    %2 = vector.broadcast %c15_i32 : i32 to vector<1x16x1xi32>
    %3 = arith.cmpi slt, %1, %2 : vector<1x16x1xi32>
    %c1_i32 = arith.constant 1 : i32
    %4 = vector.broadcast %c1_i32 : i32 to vector<1x16x1xi32>
    %5 = arith.cmpi sge, %1, %4 : vector<1x16x1xi32>
    %6 = tpu.iota {dimensions = array<i32: 0>} : vector<16x16xi32>
    %7 = tpu.iota {dimensions = array<i32: 1>} : vector<16x16xi32>
    %8 = arith.subi %7, %6 : vector<16x16xi32>
    %9 = math.absi %8 : vector<16x16xi32>
    %c1_i32_2 = arith.constant 1 : i32
    %10 = vector.broadcast %c1_i32_2 : i32 to vector<16x16xi32>
    %11 = arith.cmpi sle, %9, %10 : vector<16x16xi32>
    %cst = arith.constant 1.000000e+00 : f32
    %cst_3 = arith.constant 0.000000e+00 : f32
    %12 = vector.broadcast %cst : f32 to vector<16x16xf32>
    %13 = vector.broadcast %cst_3 : f32 to vector<16x16xf32>
    %14 = arith.select %11, %12, %13 : vector<16x16xi1>, vector<16x16xf32>
    %c1_i32_4 = arith.constant 1 : i32
    %15 = vector.broadcast %c1_i32_4 : i32 to vector<16x16xi32>
    %16 = arith.cmpi eq, %8, %15 : vector<16x16xi32>
    %cst_5 = arith.constant 1.000000e+00 : f32
    %cst_6 = arith.constant 0.000000e+00 : f32
    %17 = vector.broadcast %cst_5 : f32 to vector<16x16xf32>
    %18 = vector.broadcast %cst_6 : f32 to vector<16x16xf32>
    %19 = arith.select %16, %17, %18 : vector<16x16xi1>, vector<16x16xf32>
    %c-1_i32 = arith.constant -1 : i32
    %20 = vector.broadcast %c-1_i32 : i32 to vector<16x16xi32>
    %21 = arith.cmpi eq, %8, %20 : vector<16x16xi32>
    %cst_7 = arith.constant 1.000000e+00 : f32
    %cst_8 = arith.constant 0.000000e+00 : f32
    %22 = vector.broadcast %cst_7 : f32 to vector<16x16xf32>
    %23 = vector.broadcast %cst_8 : f32 to vector<16x16xf32>
    %24 = arith.select %21, %22, %23 : vector<16x16xi1>, vector<16x16xf32>
    %25 = arith.subf %19, %24 : vector<16x16xf32>
    %26 = math.absi %8 : vector<16x16xi32>
    %c1_i32_9 = arith.constant 1 : i32
    %27 = vector.broadcast %c1_i32_9 : i32 to vector<16x16xi32>
    %28 = arith.cmpi eq, %26, %27 : vector<16x16xi32>
    %cst_10 = arith.constant 1.000000e+00 : f32
    %cst_11 = arith.constant 0.000000e+00 : f32
    %29 = vector.broadcast %cst_10 : f32 to vector<16x16xf32>
    %30 = vector.broadcast %cst_11 : f32 to vector<16x16xf32>
    %31 = arith.select %28, %29, %30 : vector<16x16xi1>, vector<16x16xf32>
    %c0_i32 = arith.constant 0 : i32
    %32 = vector.broadcast %c0_i32 : i32 to vector<16x16xi32>
    %33 = arith.cmpi eq, %8, %32 : vector<16x16xi32>
    %cst_12 = arith.constant 2.000000e+00 : f32
    %cst_13 = arith.constant 0.000000e+00 : f32
    %34 = vector.broadcast %cst_12 : f32 to vector<16x16xf32>
    %35 = vector.broadcast %cst_13 : f32 to vector<16x16xf32>
    %36 = arith.select %33, %34, %35 : vector<16x16xi1>, vector<16x16xf32>
    %37 = arith.addf %31, %36 : vector<16x16xf32>
    %38 = vector.shape_cast %0 : vector<4x16x16xf32> to vector<64x16xf32>
    %cst_14 = arith.constant dense<0.000000e+00> : vector<64x16xf32>
    %39 = tpu.matmul %38, %14, %cst_14 {dimension_numbers = #tpu.dot_dimension_numbers<[1], [0], [0], [1], [0, 0, 1, 1], [], []>, precision = #tpu.contract_precision<fp32>} : vector<64x16xf32>, vector<16x16xf32>, vector<64x16xf32> -> vector<64x16xf32>
    %40 = vector.shape_cast %39 : vector<64x16xf32> to vector<4x16x16xf32>
    %c1_i32_15 = arith.constant 1 : i32
    %41 = tpu.dynamic_rotate %40 by %c1_i32_15 dim 1 : vector<4x16x16xf32>, i32 -> vector<4x16x16xf32>
    %cst_16 = arith.constant 0.000000e+00 : f32
    %42 = vector.shape_cast %5 : vector<1x16x1xi1> to vector<1x16x1xi1>
    %43 = vector.broadcast %42 : vector<1x16x1xi1> to vector<4x16x16xi1>
    %44 = vector.broadcast %cst_16 : f32 to vector<4x16x16xf32>
    %45 = arith.select %43, %41, %44 : vector<4x16x16xi1>, vector<4x16x16xf32>
    %46 = arith.addf %45, %40 : vector<4x16x16xf32>
    %c15_i32_17 = arith.constant 15 : i32
    %47 = tpu.dynamic_rotate %40 by %c15_i32_17 dim 1 : vector<4x16x16xf32>, i32 -> vector<4x16x16xf32>
    %cst_18 = arith.constant 0.000000e+00 : f32
    %48 = vector.shape_cast %3 : vector<1x16x1xi1> to vector<1x16x1xi1>
    %49 = vector.broadcast %48 : vector<1x16x1xi1> to vector<4x16x16xi1>
    %50 = vector.broadcast %cst_18 : f32 to vector<4x16x16xf32>
    %51 = arith.select %49, %47, %50 : vector<4x16x16xi1>, vector<4x16x16xf32>
    %52 = arith.addf %46, %51 : vector<4x16x16xf32>
    %cst_19 = arith.constant 0.111111112 : f32
    %53 = vector.broadcast %cst_19 : f32 to vector<4x16x16xf32>
    %54 = arith.mulf %52, %53 : vector<4x16x16xf32>
    %55 = vector.shape_cast %54 : vector<4x16x16xf32> to vector<64x16xf32>
    %cst_20 = arith.constant dense<0.000000e+00> : vector<64x16xf32>
    %56 = tpu.matmul %55, %25, %cst_20 {dimension_numbers = #tpu.dot_dimension_numbers<[1], [0], [0], [1], [0, 0, 1, 1], [], []>, precision = #tpu.contract_precision<fp32>} : vector<64x16xf32>, vector<16x16xf32>, vector<64x16xf32> -> vector<64x16xf32>
    %57 = vector.shape_cast %56 : vector<64x16xf32> to vector<4x16x16xf32>
    %58 = vector.shape_cast %54 : vector<4x16x16xf32> to vector<64x16xf32>
    %cst_21 = arith.constant dense<0.000000e+00> : vector<64x16xf32>
    %59 = tpu.matmul %58, %37, %cst_21 {dimension_numbers = #tpu.dot_dimension_numbers<[1], [0], [0], [1], [0, 0, 1, 1], [], []>, precision = #tpu.contract_precision<fp32>} : vector<64x16xf32>, vector<16x16xf32>, vector<64x16xf32> -> vector<64x16xf32>
    %60 = vector.shape_cast %59 : vector<64x16xf32> to vector<4x16x16xf32>
    %c1_i32_22 = arith.constant 1 : i32
    %61 = tpu.dynamic_rotate %57 by %c1_i32_22 dim 1 : vector<4x16x16xf32>, i32 -> vector<4x16x16xf32>
    %cst_23 = arith.constant 0.000000e+00 : f32
    %62 = vector.shape_cast %5 : vector<1x16x1xi1> to vector<1x16x1xi1>
    %63 = vector.broadcast %62 : vector<1x16x1xi1> to vector<4x16x16xi1>
    %64 = vector.broadcast %cst_23 : f32 to vector<4x16x16xf32>
    %65 = arith.select %63, %61, %64 : vector<4x16x16xi1>, vector<4x16x16xf32>
    %cst_24 = arith.constant 2.000000e+00 : f32
    %66 = vector.broadcast %cst_24 : f32 to vector<4x16x16xf32>
    %67 = arith.mulf %66, %57 : vector<4x16x16xf32>
    %68 = arith.addf %65, %67 : vector<4x16x16xf32>
    %c15_i32_25 = arith.constant 15 : i32
    %69 = tpu.dynamic_rotate %57 by %c15_i32_25 dim 1 : vector<4x16x16xf32>, i32 -> vector<4x16x16xf32>
    %cst_26 = arith.constant 0.000000e+00 : f32
    %70 = vector.shape_cast %3 : vector<1x16x1xi1> to vector<1x16x1xi1>
    %71 = vector.broadcast %70 : vector<1x16x1xi1> to vector<4x16x16xi1>
    %72 = vector.broadcast %cst_26 : f32 to vector<4x16x16xf32>
    %73 = arith.select %71, %69, %72 : vector<4x16x16xi1>, vector<4x16x16xf32>
    %74 = arith.addf %68, %73 : vector<4x16x16xf32>
    %cst_27 = arith.constant 2.500000e-01 : f32
    %75 = vector.broadcast %cst_27 : f32 to vector<4x16x16xf32>
    %76 = arith.mulf %74, %75 : vector<4x16x16xf32>
    %c1_i32_28 = arith.constant 1 : i32
    %77 = tpu.dynamic_rotate %60 by %c1_i32_28 dim 1 : vector<4x16x16xf32>, i32 -> vector<4x16x16xf32>
    %cst_29 = arith.constant 0.000000e+00 : f32
    %78 = vector.shape_cast %5 : vector<1x16x1xi1> to vector<1x16x1xi1>
    %79 = vector.broadcast %78 : vector<1x16x1xi1> to vector<4x16x16xi1>
    %80 = vector.broadcast %cst_29 : f32 to vector<4x16x16xf32>
    %81 = arith.select %79, %77, %80 : vector<4x16x16xi1>, vector<4x16x16xf32>
    %c15_i32_30 = arith.constant 15 : i32
    %82 = tpu.dynamic_rotate %60 by %c15_i32_30 dim 1 : vector<4x16x16xf32>, i32 -> vector<4x16x16xf32>
    %cst_31 = arith.constant 0.000000e+00 : f32
    %83 = vector.shape_cast %3 : vector<1x16x1xi1> to vector<1x16x1xi1>
    %84 = vector.broadcast %83 : vector<1x16x1xi1> to vector<4x16x16xi1>
    %85 = vector.broadcast %cst_31 : f32 to vector<4x16x16xf32>
    %86 = arith.select %84, %82, %85 : vector<4x16x16xi1>, vector<4x16x16xf32>
    %87 = arith.subf %81, %86 : vector<4x16x16xf32>
    %cst_32 = arith.constant 2.500000e-01 : f32
    %88 = vector.broadcast %cst_32 : f32 to vector<4x16x16xf32>
    %89 = arith.mulf %87, %88 : vector<4x16x16xf32>
    %90 = arith.mulf %76, %76 : vector<4x16x16xf32>
    %91 = arith.mulf %89, %89 : vector<4x16x16xf32>
    %92 = arith.addf %90, %91 : vector<4x16x16xf32>
    %cst_33 = arith.constant 9.99999974E-5 : f32
    %93 = vector.broadcast %cst_33 : f32 to vector<4x16x16xf32>
    %94 = arith.addf %92, %93 : vector<4x16x16xf32>
    %95 = math.sqrt %94 : vector<4x16x16xf32>
    %c0_34 = arith.constant 0 : index
    %c0_35 = arith.constant 0 : index
    %c0_36 = arith.constant 0 : index
    %96 = vector.load %arg2[%c0_34, %c0_35, %c0_36] : memref<4x16x16xf32, #tpu.memory_space<vmem>>, vector<4x16x16xf32>
    tpu.vector_store %arg2[%c0_34, %c0_35, %c0_36], %95 {strides = array<i32>} : memref<4x16x16xf32, #tpu.memory_space<vmem>>, vector<4x16x16xf32>,
    return
  }
  func.func @transform_0(%arg0: i32) -> (i32, i32, i32) {
    %c0_i32 = arith.constant 0 : i32
    %c0_i32_0 = arith.constant 0 : i32
    %c0_i32_1 = arith.constant 0 : i32
    return %arg0, %c0_i32, %c0_i32_0 : i32, i32, i32
  }
  func.func @transform_1(%arg0: i32) -> (i32, i32, i32) {
    %c0_i32 = arith.constant 0 : i32
    %c0_i32_0 = arith.constant 0 : i32
    %c0_i32_1 = arith.constant 0 : i32
    return %arg0, %c0_i32, %c0_i32_0 : i32, i32, i32
  }
}

</mosaic_0001>

<llo_original>
// kernel: tpu_custom_call.1
$region0: #{tpu_custom_call.1}
  #allocation0 [shape = 'u32[]', space=smem, size = 0x4, offset = 0x4, fixed_abs, tag = 'smem constant byte address 0x4 - core index']
  #allocation1 [shape = 'u32[144,128]{1,0:T(1,128)}', space=vmem, size = 0x12000, scoped, tag = 'internal scratch']
  %s0 = inlined_call_operand.hbm [shape: f32[8,16,16], index: 0, kind: input, shape index: {}]
  %s1 = inlined_call_operand.hbm [shape: f32[8,16,16], index: 1, kind: output, shape index: {}]
  %s2 = sld [smem:[#allocation0]]
  $region41: #{tpu_custom_call.1} parent=0
    _
  %s4 = ssub.s32 1, %s2
  %s5 = scalar_select 0, %s4, %s2
  $region1: #{tpu_custom_call.1} parent=0
    #allocation2 [shape = 'u8[65536]{0}', space=vmem, size = 0x10000, scoped, tag = 'input window, operand 0']
    #allocation3 [shape = 's32[2]{0}', space=sflag, size = 0x8, scoped, tag = 'scoped memory for tpu_custom_call.1']
    #allocation4 [shape = 's32[2]{0}', space=sflag, size = 0x8, scoped, tag = 'scoped memory for tpu_custom_call.1']
    #allocation5 [shape = 'u8[65536]{0}', space=vmem, size = 0x10000, scoped, tag = 'output window, operand 0']
    %6 = vsyncpa [#allocation3], 0
    %s7 = scalar_lea.sflag [#allocation3], 1
    %8 = vsyncpa %s7, 0
    %9 = vsyncpa [#allocation4], 0
    %s10 = scalar_lea.sflag [#allocation4], 1
    %11 = vsyncpa %s10, 0
    loop: start=0, step=1, limit=4
    $region2: #{tpu_custom_call.1} parent=1 // loop_pre_header
      _
    $region3: #{tpu_custom_call.1} parent=1 // loop_header
      %s13 = sphi 0, %s17
      %p14 = scmp.ge.s32.totalorder %s13, 4
      %s23 = sphi 0, %s25
      %s26 = sphi 0, %s23
      %s27 = sphi 0, %s26
      %s43 = sphi 0, %s27
      %s49 = sphi 0, %s51
      %s52 = sphi 0, %s49
      %s53 = sphi 0, %s52
      %s69 = sphi 0, %s53
    $region4: #{tpu_custom_call.1} parent=1 // loop_header_branch
      %16 = sbr.rel (%p14) target = $region8
    $region5: #{tpu_custom_call.1} parent=1 // loop_body
      %s18 = ssub.s32 %s13, 1
      %s19 = ssub.s32 %s13, 2
      %s20 = sadd.s32 %s13, 1
      %s21 = ssub.s32 %s13, %s20
      %p22 = scmp.eq.s32.totalorder %s21, 0
      %s24 = sadd.s32 %s23, 1
      %s25 = scalar_select %p22, %s23, %s24
      %p28 = pneg %p22
      %p29 = scmp.eq.s32.totalorder %s13, 1
      %p30 = por %p28, %p29
      %p31 = scmp.ne.s32.totalorder %s23, %s26
      %p32 = scmp.eq.s32.totalorder %s13, 0
      %p33 = por %p31, %p32
      %p34 = scmp.ne.s32.totalorder %s23, %s26
      %p35 = scmp.eq.s32.totalorder %s18, 1
      %p36 = por %p34, %p35
      %p37 = scmp.ne.s32.totalorder %s26, %s27
      %p38 = scmp.eq.s32.totalorder %s18, 0
      %p39 = por %p37, %p38
      %p40 = scmp.ne.s32.totalorder %s26, %s27
      %p41 = scmp.eq.s32.totalorder %s19, 1
      %p42 = por %p40, %p41
      %p44 = scmp.ne.s32.totalorder %s27, %s43
      %p45 = scmp.eq.s32.totalorder %s19, 0
      %p46 = por %p44, %p45
      %s47 = ssub.s32 %s13, %s20
      %p48 = scmp.eq.s32.totalorder %s47, 0
      %s50 = sadd.s32 %s49, 1
      %s51 = scalar_select %p48, %s49, %s50
      %p54 = pneg %p48
      %p55 = scmp.eq.s32.totalorder %s13, 1
      %p56 = por %p54, %p55
      %p57 = scmp.ne.s32.totalorder %s49, %s52
      %p58 = scmp.eq.s32.totalorder %s13, 0
      %p59 = por %p57, %p58
      %p60 = scmp.ne.s32.totalorder %s49, %s52
      %p61 = scmp.eq.s32.totalorder %s18, 1
      %p62 = por %p60, %p61
      %p63 = scmp.ne.s32.totalorder %s52, %s53
      %p64 = scmp.eq.s32.totalorder %s18, 0
      %p65 = por %p63, %p64
      %p66 = scmp.ne.s32.totalorder %s52, %s53
      %p67 = scmp.eq.s32.totalorder %s19, 1
      %p68 = por %p66, %p67
      %p70 = scmp.ne.s32.totalorder %s53, %s69
      %p71 = scmp.eq.s32.totalorder %s19, 0
      %p72 = por %p70, %p71
      %p73 = scmp.le.s32.totalorder 1, %s13
      %p74 = scmp.lt.s32.totalorder %s13, 3
      %p75 = pnand %p73, %p74
      %p76 = pneg %p75
      // Predicated region
      $region9: #{tpu_custom_call.1} parent=5 // pred_check
        _
      $region10: #{tpu_custom_call.1} parent=5 // pred_check_branch
        %78 = sbr.rel (%p75) target = $region12
      $region11: #{tpu_custom_call.1} parent=5 // pred_region
        %s79 = ssub.s32 %s13, 1
      $region12: #{tpu_custom_call.1} parent=5 // pred_fallthru
        _
      %p80 = scmp.lt.s32.totalorder %s13, 2
      // Predicated region
      $region13: #{tpu_custom_call.1} parent=5 // pred_check
        %p81 = pneg %p80
      $region14: #{tpu_custom_call.1} parent=5 // pred_check_branch
        %83 = sbr.rel (%p81) target = $region16
      $region15: #{tpu_custom_call.1} parent=5 // pred_region
        // Predicated region
        $region17: #{tpu_custom_call.1} parent=15 // pred_check
          %p84 = pneg %p33
        $region18: #{tpu_custom_call.1} parent=15 // pred_check_branch
          %86 = sbr.rel (%p84) target = $region20
        $region19: #{tpu_custom_call.1} parent=15 // pred_region
          %s87 = sand.u32 %s23, 1
          %s88 = scalar_lea.sflag [#allocation3], %s87
          %s89 = sand.u32 %s23, 1
          %s90 = smul.addr %s89, 64
          %s91 = scalar_lea.vmem [#allocation2], %s90
          %s92 = smul.u32 4, %s13
          %s94 = ssub.s32 1024, 1024
          %95 = vsyncadd %s88, %s94
          %s96 = smul.addr %s92, 2
          %s97 = smul.addr %s96, 128
          %s98 = scalar_lea.hbm %s0, %s97
          %s99 = sshll.u32 %s91, 4
          %s100 = int_to_ptr.vmem [resolvable:$true] %s99
          %105 = dma.hbm_to_vmem [thread:$0]  %s98, 1024, %s100, %s88, 128, 128, 8
        $region20: #{tpu_custom_call.1} parent=15 // pred_fallthru
          _
      $region16: #{tpu_custom_call.1} parent=5 // pred_fallthru
        _
      %p106 = scmp.le.s32.totalorder 1, %s13
      %p107 = scmp.lt.s32.totalorder %s13, 3
      %p108 = pnand %p106, %p107
      %p109 = pneg %p108
      // Predicated region
      $region21: #{tpu_custom_call.1} parent=5 // pred_check
        _
      $region22: #{tpu_custom_call.1} parent=5 // pred_check_branch
        %111 = sbr.rel (%p108) target = $region24
      $region23: #{tpu_custom_call.1} parent=5 // pred_region
        %s112 = ssub.s32 %s13, 1
        %s113 = sand.u32 %s26, 1
        %s114 = scalar_lea.sflag [#allocation3], %s113
        %s115 = sand.u32 %s26, 1
        %s116 = smul.addr %s115, 64
        %s117 = scalar_lea.vmem [#allocation2], %s116
        // Predicated region
        $region25: #{tpu_custom_call.1} parent=23 // pred_check
          %p118 = pneg %p39
        $region26: #{tpu_custom_call.1} parent=23 // pred_check_branch
          %120 = sbr.rel (%p118) target = $region28
        $region27: #{tpu_custom_call.1} parent=23 // pred_region
          %121 = dma.done %s114, 1024
        $region28: #{tpu_custom_call.1} parent=23 // pred_fallthru
          _
        %s122 = sand.u32 %s26, 1
        %s123 = scalar_lea.sflag [#allocation3], %s122
        %s124 = sand.u32 %s26, 1
        %s125 = smul.addr %s124, 64
        %s126 = scalar_lea.vmem [#allocation2], %s125
        %p127 = pneg %p39
        %p128 = pneg %p36
        %p129 = pneg %p65
        %p130 = pneg %p62
        %s131 = sand.u32 %s52, 1
        %s132 = scalar_lea.sflag [#allocation4], %s131
        %s133 = sand.u32 %s52, 1
        %s134 = smul.addr %s133, 64
        %s135 = scalar_lea.vmem [#allocation5], %s134
        %s136 = smul.u32 4, %s18
        %s137 = smul.u32 4, %s18
        %v138 = vld [vmem:[%s117] sm:$0xff]
        %v139 = vld [vmem:[%s117 + $0x8] sm:$0xff]
        %v140 = vld [vmem:[%s117 + $0x10] sm:$0xff]
        %v141 = vld [vmem:[%s117 + $0x18] sm:$0xff]
        %v142 = vld [vmem:[%s117 + $0x20] sm:$0xff]
        %v143 = vld [vmem:[%s117 + $0x28] sm:$0xff]
        %v144 = vld [vmem:[%s117 + $0x30] sm:$0xff]
        %v145 = vld [vmem:[%s117 + $0x38] sm:$0xff]
        %v146 = vlaneseq
        %v147 = vshrl.u32 %v146, 7
        %v148 = vadd.s32 %v147, 8
        %vm149 = vcmp.lt.s32.totalorder %v147, 15
        %vm150 = vcmp.lt.s32.totalorder %v148, 15
        %vm151 = vcmp.ge.s32.totalorder %v147, 1
        %vm152 = vcmp.ge.s32.totalorder %v148, 1
        %v153 = vlaneseq
        %v154 = vand.u32 %v153, 127
        %v155 = vsub.s32 %v154, %v147
        %v156 = vsub.s32 %v154, %v148
        %vm157 = vcmp.lt.s32.totalorder %v155, 0
        %v158 = vsub.s32 0, %v155
        %v159 = vsel %vm157, %v158, %v155
        %vm160 = vcmp.lt.s32.totalorder %v156, 0
        %v161 = vsub.s32 0, %v156
        %v162 = vsel %vm160, %v161, %v156
        %vm163 = vcmp.le.s32.totalorder %v159, 1
        %vm164 = vcmp.le.s32.totalorder %v162, 1
        %v165 = vsel %vm163, 1.0, 0.0
        %v166 = vsel %vm164, 1.0, 0.0
        %vm167 = vcmp.eq.s32.totalorder %v155, 1
        %vm168 = vcmp.eq.s32.totalorder %v156, 1
        %v169 = vsel %vm167, 1.0, 0.0
        %v170 = vsel %vm168, 1.0, 0.0
        %vm171 = vcmp.eq.s32.totalorder %v155, 4294967295
        %vm172 = vcmp.eq.s32.totalorder %v156, 4294967295
        %v173 = vsel %vm171, 1.0, 0.0
        %v174 = vsel %vm172, 1.0, 0.0
        %v175 = vsub.f32 %v169, %v173
        %v176 = vsub.f32 %v170, %v174
        %vm177 = vcmp.eq.s32.totalorder %v159, 1
        %vm178 = vcmp.eq.s32.totalorder %v162, 1
        %v179 = vsel %vm177, 1.0, 0.0
        %v180 = vsel %vm178, 1.0, 0.0
        %vm181 = vcmp.eq.s32.totalorder %v155, 0
        %vm182 = vcmp.eq.s32.totalorder %v156, 0
        %v183 = vsel %vm181, 2.0, 0.0
        %v184 = vsel %vm182, 2.0, 0.0
        %v185 = vadd.f32 %v179, %v183
        %v186 = vadd.f32 %v180, %v184
        %vm187 = vcmask 130048
        %v189 = vsel %vm187, %v138, 0
        %v192 = vsel %vm187, %v139, 0
        %v195 = vsel %vm187, %v140, 0
        %v198 = vsel %vm187, %v141, 0
        %v201 = vsel %vm187, %v142, 0
        %v204 = vsel %vm187, %v143, 0
        %v207 = vsel %vm187, %v144, 0
        %v210 = vsel %vm187, %v145, 0
        %212 = vmatprep.subr.mxu0 0.0
        %213 = vmatpush1.msra.mxu0 0.0
        %214 = vmatprep.subr.mxu0 0.0
        %215 = vmatpush1.msra.mxu0 0.0
        %216 = vmatprep.subr.mxu0 0.0
        %217 = vmatpush1.msra.mxu0 0.0
        %218 = vmatprep.subr.mxu0 0.0
        %219 = vmatpush1.msra.mxu0 0.0
        %220 = vmatprep.subr.mxu0 0.0
        %221 = vmatpush1.msra.mxu0 0.0
        %222 = vmatprep.subr.mxu0 0.0
        %223 = vmatpush1.msra.mxu0 0.0
        %224 = vmatprep.subr.mxu0 0.0
        %225 = vmatpush1.msra.mxu0 0.0
        %226 = vmatprep.subr.mxu0 0.0
        %227 = vmatpush1.msra.mxu0 0.0
        %228 = vmatprep.subr.mxu0 0.0
        %229 = vmatpush1.msra.mxu0 0.0
        %230 = vmatprep.subr.mxu0 0.0
        %231 = vmatpush1.msra.mxu0 0.0
        %232 = vmatprep.subr.mxu0 0.0
        %233 = vmatpush1.msra.mxu0 0.0
        %234 = vmatprep.subr.mxu0 0.0
        %235 = vmatpush1.msra.mxu0 0.0
        %236 = vmatprep.subr.mxu0 0.0
        %237 = vmatpush1.msra.mxu0 0.0
        %238 = vmatprep.subr.mxu0 0.0
        %239 = vmatpush1.msra.mxu0 0.0
        %240 = vmatprep.subr.mxu0 0.0
        %241 = vmatpush1.msra.mxu0 %v166
        %242 = vmatprep.subr.mxu0 0.0
        %243 = vmatpush1.msra.mxu0 %v165
        %244 = vmatprep.subr.mxu0 0.0
        %245 = vmatpush2.msra.mxu0 0.0
        %246 = vmatprep.subr.mxu0 0.0
        %247 = vmatpush2.msra.mxu0 0.0
        %248 = vmatprep.subr.mxu0 0.0
        %249 = vmatpush2.msra.mxu0 0.0
        %250 = vmatprep.subr.mxu0 0.0
        %251 = vmatpush2.msra.mxu0 0.0
        %252 = vmatprep.subr.mxu0 0.0
        %253 = vmatpush2.msra.mxu0 0.0
        %254 = vmatprep.subr.mxu0 0.0
        %255 = vmatpush2.msra.mxu0 0.0
        %256 = vmatprep.subr.mxu0 0.0
        %257 = vmatpush2.msra.mxu0 0.0
        %258 = vmatprep.subr.mxu0 0.0
        %259 = vmatpush2.msra.mxu0 0.0
        %260 = vmatprep.subr.mxu0 0.0
        %261 = vmatpush2.msra.mxu0 0.0
        %262 = vmatprep.subr.mxu0 0.0
        %263 = vmatpush2.msra.mxu0 0.0
        %264 = vmatprep.subr.mxu0 0.0
        %265 = vmatpush2.msra.mxu0 0.0
        %266 = vmatprep.subr.mxu0 0.0
        %267 = vmatpush2.msra.mxu0 0.0
        %268 = vmatprep.subr.mxu0 0.0
        %269 = vmatpush2.msra.mxu0 0.0
        %270 = vmatprep.subr.mxu0 0.0
        %271 = vmatpush2.msra.mxu0 0.0
        %272 = vmatprep.subr.mxu0 0.0
        %273 = vmatpush2.msra.mxu0 0.0
        %274 = vmatprep.subr.mxu0 0.0
        %275 = vmatpush2.msra.mxu0 0.0
        %276 = vmatprep.mubr.f32.mxu0 0.0
        %v277 = vand.u32 %v189, 4294901760
        %v278 = vsub.f32 %v189, %v277
        %v279 = vand.u32 %v278, 4294901760
        %v280 = vsub.f32 %v278, %v279
        %v281 = vand.u32 %v280, 4294901760
        %282 = vmatmul.mubr.f32.gmra.mxu0 %v281
        %v283 = vpop.f32.mrf.mxu0
        %v284 = vadd.f32 0.0, %v283
        %v285 = vpop.f32.mrf.mxu0
        %286 = vmatprep.mubr.f32.mxu0 0.0
        %v287 = vand.u32 %v192, 4294901760
        %v288 = vsub.f32 %v192, %v287
        %v289 = vand.u32 %v288, 4294901760
        %v290 = vsub.f32 %v288, %v289
        %v291 = vand.u32 %v290, 4294901760
        %292 = vmatmul.mubr.f32.gmra.mxu0 %v291
        %v293 = vpop.f32.mrf.mxu0
        %v294 = vadd.f32 0.0, %v293
        %v295 = vpop.f32.mrf.mxu0
        %296 = vmatprep.mubr.f32.mxu0 0.0
        %v297 = vand.u32 %v195, 4294901760
        %v298 = vsub.f32 %v195, %v297
        %v299 = vand.u32 %v298, 4294901760
        %v300 = vsub.f32 %v298, %v299
        %v301 = vand.u32 %v300, 4294901760
        %302 = vmatmul.mubr.f32.gmra.mxu0 %v301
        %v303 = vpop.f32.mrf.mxu0
        %v304 = vadd.f32 0.0, %v303
        %v305 = vpop.f32.mrf.mxu0
        %306 = vmatprep.mubr.f32.mxu0 0.0
        %v307 = vand.u32 %v198, 4294901760
        %v308 = vsub.f32 %v198, %v307
        %v309 = vand.u32 %v308, 4294901760
        %v310 = vsub.f32 %v308, %v309
        %v311 = vand.u32 %v310, 4294901760
        %312 = vmatmul.mubr.f32.gmra.mxu0 %v311
        %v313 = vpop.f32.mrf.mxu0
        %v314 = vadd.f32 0.0, %v313
        %v315 = vpop.f32.mrf.mxu0
        %316 = vmatprep.mubr.f32.mxu0 0.0
        %v317 = vand.u32 %v201, 4294901760
        %v318 = vsub.f32 %v201, %v317
        %v319 = vand.u32 %v318, 4294901760
        %v320 = vsub.f32 %v318, %v319
        %v321 = vand.u32 %v320, 4294901760
        %322 = vmatmul.mubr.f32.gmra.mxu0 %v321
        %v323 = vpop.f32.mrf.mxu0
        %v324 = vadd.f32 0.0, %v323
        %v325 = vpop.f32.mrf.mxu0
        %326 = vmatprep.mubr.f32.mxu0 0.0
        %v327 = vand.u32 %v204, 4294901760
        %v328 = vsub.f32 %v204, %v327
        %v329 = vand.u32 %v328, 4294901760
        %v330 = vsub.f32 %v328, %v329
        %v331 = vand.u32 %v330, 4294901760
        %332 = vmatmul.mubr.f32.gmra.mxu0 %v331
        %v333 = vpop.f32.mrf.mxu0
        %v334 = vadd.f32 0.0, %v333
        %v335 = vpop.f32.mrf.mxu0
        %336 = vmatprep.mubr.f32.mxu0 0.0
        %v337 = vand.u32 %v207, 4294901760
        %v338 = vsub.f32 %v207, %v337
        %v339 = vand.u32 %v338, 4294901760
        %v340 = vsub.f32 %v338, %v339
        %v341 = vand.u32 %v340, 4294901760
        %342 = vmatmul.mubr.f32.gmra.mxu0 %v341
        %v343 = vpop.f32.mrf.mxu0
        %v344 = vadd.f32 0.0, %v343
        %v345 = vpop.f32.mrf.mxu0
        %346 = vmatprep.mubr.f32.mxu0 0.0
        %v347 = vand.u32 %v210, 4294901760
        %v348 = vsub.f32 %v210, %v347
        %v349 = vand.u32 %v348, 4294901760
        %v350 = vsub.f32 %v348, %v349
        %v351 = vand.u32 %v350, 4294901760
        %352 = vmatmul.mubr.f32.gmra.mxu0 %v351
        %v353 = vpop.f32.mrf.mxu0
        %v354 = vadd.f32 0.0, %v353
        %v355 = vpop.f32.mrf.mxu0
        %356 = vdwg.mxu0
        %357 = vmatprep.subr.mxu0 0.0
        %358 = vmatpush1.msra.mxu0 0.0
        %359 = vmatprep.subr.mxu0 0.0
        %360 = vmatpush1.msra.mxu0 0.0
        %361 = vmatprep.subr.mxu0 0.0
        %362 = vmatpush1.msra.mxu0 0.0
        %363 = vmatprep.subr.mxu0 0.0
        %364 = vmatpush1.msra.mxu0 0.0
        %365 = vmatprep.subr.mxu0 0.0
        %366 = vmatpush1.msra.mxu0 0.0
        %367 = vmatprep.subr.mxu0 0.0
        %368 = vmatpush1.msra.mxu0 0.0
        %369 = vmatprep.subr.mxu0 0.0
        %370 = vmatpush1.msra.mxu0 0.0
        %371 = vmatprep.subr.mxu0 0.0
        %372 = vmatpush1.msra.mxu0 0.0
        %373 = vmatprep.subr.mxu0 0.0
        %374 = vmatpush1.msra.mxu0 0.0
        %375 = vmatprep.subr.mxu0 0.0
        %376 = vmatpush1.msra.mxu0 0.0
        %377 = vmatprep.subr.mxu0 0.0
        %378 = vmatpush1.msra.mxu0 0.0
        %379 = vmatprep.subr.mxu0 0.0
        %380 = vmatpush1.msra.mxu0 0.0
        %381 = vmatprep.subr.mxu0 0.0
        %382 = vmatpush1.msra.mxu0 0.0
        %383 = vmatprep.subr.mxu0 0.0
        %384 = vmatpush1.msra.mxu0 0.0
        %385 = vmatprep.subr.mxu0 0.0
        %v386 = vsub.f32 %v166, %v166
        %v387 = vand.u32 %v386, 4294901760
        %v388 = vsub.f32 %v386, %v387
        %v389 = vand.u32 %v388, 4294901760
        %390 = vmatpush1.msra.mxu0 %v389
        %391 = vmatprep.subr.mxu0 0.0
        %v392 = vsub.f32 %v165, %v165
        %v393 = vand.u32 %v392, 4294901760
        %v394 = vsub.f32 %v392, %v393
        %v395 = vand.u32 %v394, 4294901760
        %396 = vmatpush1.msra.mxu0 %v395
        %397 = vmatprep.subr.mxu0 0.0
        %398 = vmatpush2.msra.mxu0 0.0
        %399 = vmatprep.subr.mxu0 0.0
        %400 = vmatpush2.msra.mxu0 0.0
        %401 = vmatprep.subr.mxu0 0.0
        %402 = vmatpush2.msra.mxu0 0.0
        %403 = vmatprep.subr.mxu0 0.0
        %404 = vmatpush2.msra.mxu0 0.0
        %405 = vmatprep.subr.mxu0 0.0
        %406 = vmatpush2.msra.mxu0 0.0
        %407 = vmatprep.subr.mxu0 0.0
        %408 = vmatpush2.msra.mxu0 0.0
        %409 = vmatprep.subr.mxu0 0.0
        %410 = vmatpush2.msra.mxu0 0.0
        %411 = vmatprep.subr.mxu0 0.0
        %412 = vmatpush2.msra.mxu0 0.0
        %413 = vmatprep.subr.mxu0 0.0
        %414 = vmatpush2.msra.mxu0 0.0
        %415 = vmatprep.subr.mxu0 0.0
        %416 = vmatpush2.msra.mxu0 0.0
        %417 = vmatprep.subr.mxu0 0.0
        %418 = vmatpush2.msra.mxu0 0.0
        %419 = vmatprep.subr.mxu0 0.0
        %420 = vmatpush2.msra.mxu0 0.0
        %421 = vmatprep.subr.mxu0 0.0
        %422 = vmatpush2.msra.mxu0 0.0
        %423 = vmatprep.subr.mxu0 0.0
        %424 = vmatpush2.msra.mxu0 0.0
        %425 = vmatprep.subr.mxu0 0.0
        %426 = vmatpush2.msra.mxu0 0.0
        %427 = vmatprep.subr.mxu0 0.0
        %428 = vmatpush2.msra.mxu0 0.0
        %429 = vmatprep.mubr.f32.mxu0 0.0
        %v430 = vand.u32 %v189, 4294901760
        %431 = vmatmul.mubr.f32.gmra.mxu0 %v430
        %v432 = vpop.f32.mrf.mxu0
        %v433 = vadd.f32 %v284, %v432
        %v434 = vpop.f32.mrf.mxu0
        %435 = vmatprep.mubr.f32.mxu0 0.0
        %v436 = vand.u32 %v192, 4294901760
        %437 = vmatmul.mubr.f32.gmra.mxu0 %v436
        %v438 = vpop.f32.mrf.mxu0
        %v439 = vadd.f32 %v294, %v438
        %v440 = vpop.f32.mrf.mxu0
        %441 = vmatprep.mubr.f32.mxu0 0.0
        %v442 = vand.u32 %v195, 4294901760
        %443 = vmatmul.mubr.f32.gmra.mxu0 %v442
        %v444 = vpop.f32.mrf.mxu0
        %v445 = vadd.f32 %v304, %v444
        %v446 = vpop.f32.mrf.mxu0
        %447 = vmatprep.mubr.f32.mxu0 0.0
        %v448 = vand.u32 %v198, 4294901760
        %449 = vmatmul.mubr.f32.gmra.mxu0 %v448
        %v450 = vpop.f32.mrf.mxu0
        %v451 = vadd.f32 %v314, %v450
        %v452 = vpop.f32.mrf.mxu0
        %453 = vmatprep.mubr.f32.mxu0 0.0
        %v454 = vand.u32 %v201, 4294901760
        %455 = vmatmul.mubr.f32.gmra.mxu0 %v454
        %v456 = vpop.f32.mrf.mxu0
        %v457 = vadd.f32 %v324, %v456
        %v458 = vpop.f32.mrf.mxu0
        %459 = vmatprep.mubr.f32.mxu0 0.0
        %v460 = vand.u32 %v204, 4294901760
        %461 = vmatmul.mubr.f32.gmra.mxu0 %v460
        %v462 = vpop.f32.mrf.mxu0
        %v463 = vadd.f32 %v334, %v462
        %v464 = vpop.f32.mrf.mxu0
        %465 = vmatprep.mubr.f32.mxu0 0.0
        %v466 = vand.u32 %v207, 4294901760
        %467 = vmatmul.mubr.f32.gmra.mxu0 %v466
        %v468 = vpop.f32.mrf.mxu0
        %v469 = vadd.f32 %v344, %v468
        %v470 = vpop.f32.mrf.mxu0
        %471 = vmatprep.mubr.f32.mxu0 0.0
        %v472 = vand.u32 %v210, 4294901760
        %473 = vmatmul.mubr.f32.gmra.mxu0 %v472
        %v474 = vpop.f32.mrf.mxu0
        %v475 = vadd.f32 %v354, %v474
        %v476 = vpop.f32.mrf.mxu0
        %477 = vdwg.mxu0
        %478 = vmatprep.subr.mxu0 0.0
        %479 = vmatpush1.msra.mxu0 0.0
        %480 = vmatprep.subr.mxu0 0.0
        %481 = vmatpush1.msra.mxu0 0.0
        %482 = vmatprep.subr.mxu0 0.0
        %483 = vmatpush1.msra.mxu0 0.0
        %484 = vmatprep.subr.mxu0 0.0
        %485 = vmatpush1.msra.mxu0 0.0
        %486 = vmatprep.subr.mxu0 0.0
        %487 = vmatpush1.msra.mxu0 0.0
        %488 = vmatprep.subr.mxu0 0.0
        %489 = vmatpush1.msra.mxu0 0.0
        %490 = vmatprep.subr.mxu0 0.0
        %491 = vmatpush1.msra.mxu0 0.0
        %492 = vmatprep.subr.mxu0 0.0
        %493 = vmatpush1.msra.mxu0 0.0
        %494 = vmatprep.subr.mxu0 0.0
        %495 = vmatpush1.msra.mxu0 0.0
        %496 = vmatprep.subr.mxu0 0.0
        %497 = vmatpush1.msra.mxu0 0.0
        %498 = vmatprep.subr.mxu0 0.0
        %499 = vmatpush1.msra.mxu0 0.0
        %500 = vmatprep.subr.mxu0 0.0
        %501 = vmatpush1.msra.mxu0 0.0
        %502 = vmatprep.subr.mxu0 0.0
        %503 = vmatpush1.msra.mxu0 0.0
        %504 = vmatprep.subr.mxu0 0.0
        %505 = vmatpush1.msra.mxu0 0.0
        %506 = vmatprep.subr.mxu0 0.0
        %v507 = vsub.f32 %v166, %v166
        %508 = vmatpush1.msra.mxu0 %v507
        %509 = vmatprep.subr.mxu0 0.0
        %v510 = vsub.f32 %v165, %v165
        %511 = vmatpush1.msra.mxu0 %v510
        %512 = vmatprep.subr.mxu0 0.0
        %513 = vmatpush2.msra.mxu0 0.0
        %514 = vmatprep.subr.mxu0 0.0
        %515 = vmatpush2.msra.mxu0 0.0
        %516 = vmatprep.subr.mxu0 0.0
        %517 = vmatpush2.msra.mxu0 0.0
        %518 = vmatprep.subr.mxu0 0.0
        %519 = vmatpush2.msra.mxu0 0.0
        %520 = vmatprep.subr.mxu0 0.0
        %521 = vmatpush2.msra.mxu0 0.0
        %522 = vmatprep.subr.mxu0 0.0
        %523 = vmatpush2.msra.mxu0 0.0
        %524 = vmatprep.subr.mxu0 0.0
        %525 = vmatpush2.msra.mxu0 0.0
        %526 = vmatprep.subr.mxu0 0.0
        %527 = vmatpush2.msra.mxu0 0.0
        %528 = vmatprep.subr.mxu0 0.0
        %529 = vmatpush2.msra.mxu0 0.0
        %530 = vmatprep.subr.mxu0 0.0
        %531 = vmatpush2.msra.mxu0 0.0
        %532 = vmatprep.subr.mxu0 0.0
        %533 = vmatpush2.msra.mxu0 0.0
        %534 = vmatprep.subr.mxu0 0.0
        %535 = vmatpush2.msra.mxu0 0.0
        %536 = vmatprep.subr.mxu0 0.0
        %537 = vmatpush2.msra.mxu0 0.0
        %538 = vmatprep.subr.mxu0 0.0
        %539 = vmatpush2.msra.mxu0 0.0
        %540 = vmatprep.subr.mxu0 0.0
        %541 = vmatpush2.msra.mxu0 0.0
        %542 = vmatprep.subr.mxu0 0.0
        %543 = vmatpush2.msra.mxu0 0.0
        %544 = vmatprep.mubr.f32.mxu0 0.0
        %v545 = vand.u32 %v189, 4294901760
        %v546 = vsub.f32 %v189, %v545
        %547 = vmatmul.mubr.f32.gmra.mxu0 %v546
        %v548 = vpop.f32.mrf.mxu0
        %v549 = vadd.f32 %v433, %v548
        %v550 = vpop.f32.mrf.mxu0
        %551 = vmatprep.mubr.f32.mxu0 0.0
        %v552 = vand.u32 %v192, 4294901760
        %v553 = vsub.f32 %v192, %v552
        %554 = vmatmul.mubr.f32.gmra.mxu0 %v553
        %v555 = vpop.f32.mrf.mxu0
        %v556 = vadd.f32 %v439, %v555
        %v557 = vpop.f32.mrf.mxu0
        %558 = vmatprep.mubr.f32.mxu0 0.0
        %v559 = vand.u32 %v195, 4294901760
        %v560 = vsub.f32 %v195, %v559
        %561 = vmatmul.mubr.f32.gmra.mxu0 %v560
        %v562 = vpop.f32.mrf.mxu0
        %v563 = vadd.f32 %v445, %v562
        %v564 = vpop.f32.mrf.mxu0
        %565 = vmatprep.mubr.f32.mxu0 0.0
        %v566 = vand.u32 %v198, 4294901760
        %v567 = vsub.f32 %v198, %v566
        %568 = vmatmul.mubr.f32.gmra.mxu0 %v567
        %v569 = vpop.f32.mrf.mxu0
        %v570 = vadd.f32 %v451, %v569
        %v571 = vpop.f32.mrf.mxu0
        %572 = vmatprep.mubr.f32.mxu0 0.0
        %v573 = vand.u32 %v201, 4294901760
        %v574 = vsub.f32 %v201, %v573
        %575 = vmatmul.mubr.f32.gmra.mxu0 %v574
        %v576 = vpop.f32.mrf.mxu0
        %v577 = vadd.f32 %v457, %v576
        %v578 = vpop.f32.mrf.mxu0
        %579 = vmatprep.mubr.f32.mxu0 0.0
        %v580 = vand.u32 %v204, 4294901760
        %v581 = vsub.f32 %v204, %v580
        %582 = vmatmul.mubr.f32.gmra.mxu0 %v581
        %v583 = vpop.f32.mrf.mxu0
        %v584 = vadd.f32 %v463, %v583
        %v585 = vpop.f32.mrf.mxu0
        %586 = vmatprep.mubr.f32.mxu0 0.0
        %v587 = vand.u32 %v207, 4294901760
        %v588 = vsub.f32 %v207, %v587
        %589 = vmatmul.mubr.f32.gmra.mxu0 %v588
        %v590 = vpop.f32.mrf.mxu0
        %v591 = vadd.f32 %v469, %v590
        %v592 = vpop.f32.mrf.mxu0
        %593 = vmatprep.mubr.f32.mxu0 0.0
        %v594 = vand.u32 %v210, 4294901760
        %v595 = vsub.f32 %v210, %v594
        %596 = vmatmul.mubr.f32.gmra.mxu0 %v595
        %v597 = vpop.f32.mrf.mxu0
        %v598 = vadd.f32 %v475, %v597
        %v599 = vpop.f32.mrf.mxu0
        %600 = vdwg.mxu0
        %601 = vmatprep.subr.mxu0 0.0
        %602 = vmatpush1.msra.mxu0 0.0
        %603 = vmatprep.subr.mxu0 0.0
        %604 = vmatpush1.msra.mxu0 0.0
        %605 = vmatprep.subr.mxu0 0.0
        %606 = vmatpush1.msra.mxu0 0.0
        %607 = vmatprep.subr.mxu0 0.0
        %608 = vmatpush1.msra.mxu0 0.0
        %609 = vmatprep.subr.mxu0 0.0
        %610 = vmatpush1.msra.mxu0 0.0
        %611 = vmatprep.subr.mxu0 0.0
        %612 = vmatpush1.msra.mxu0 0.0
        %613 = vmatprep.subr.mxu0 0.0
        %614 = vmatpush1.msra.mxu0 0.0
        %615 = vmatprep.subr.mxu0 0.0
        %616 = vmatpush1.msra.mxu0 0.0
        %617 = vmatprep.subr.mxu0 0.0
        %618 = vmatpush1.msra.mxu0 0.0
        %619 = vmatprep.subr.mxu0 0.0
        %620 = vmatpush1.msra.mxu0 0.0
        %621 = vmatprep.subr.mxu0 0.0
        %622 = vmatpush1.msra.mxu0 0.0
        %623 = vmatprep.subr.mxu0 0.0
        %624 = vmatpush1.msra.mxu0 0.0
        %625 = vmatprep.subr.mxu0 0.0
        %626 = vmatpush1.msra.mxu0 0.0
        %627 = vmatprep.subr.mxu0 0.0
        %628 = vmatpush1.msra.mxu0 0.0
        %629 = vmatprep.subr.mxu0 0.0
        %630 = vmatpush1.msra.mxu0 %v166
        %631 = vmatprep.subr.mxu0 0.0
        %632 = vmatpush1.msra.mxu0 %v165
        %633 = vmatprep.subr.mxu0 0.0
        %634 = vmatpush2.msra.mxu0 0.0
        %635 = vmatprep.subr.mxu0 0.0
        %636 = vmatpush2.msra.mxu0 0.0
        %637 = vmatprep.subr.mxu0 0.0
        %638 = vmatpush2.msra.mxu0 0.0
        %639 = vmatprep.subr.mxu0 0.0
        %640 = vmatpush2.msra.mxu0 0.0
        %641 = vmatprep.subr.mxu0 0.0
        %642 = vmatpush2.msra.mxu0 0.0
        %643 = vmatprep.subr.mxu0 0.0
        %644 = vmatpush2.msra.mxu0 0.0
        %645 = vmatprep.subr.mxu0 0.0
        %646 = vmatpush2.msra.mxu0 0.0
        %647 = vmatprep.subr.mxu0 0.0
        %648 = vmatpush2.msra.mxu0 0.0
        %649 = vmatprep.subr.mxu0 0.0
        %650 = vmatpush2.msra.mxu0 0.0
        %651 = vmatprep.subr.mxu0 0.0
        %652 = vmatpush2.msra.mxu0 0.0
        %653 = vmatprep.subr.mxu0 0.0
        %654 = vmatpush2.msra.mxu0 0.0
        %655 = vmatprep.subr.mxu0 0.0
        %656 = vmatpush2.msra.mxu0 0.0
        %657 = vmatprep.subr.mxu0 0.0
        %658 = vmatpush2.msra.mxu0 0.0
        %659 = vmatprep.subr.mxu0 0.0
        %660 = vmatpush2.msra.mxu0 0.0
        %661 = vmatprep.subr.mxu0 0.0
        %662 = vmatpush2.msra.mxu0 0.0
        %663 = vmatprep.subr.mxu0 0.0
        %664 = vmatpush2.msra.mxu0 0.0
        %665 = vmatprep.mubr.f32.mxu0 0.0
        %v666 = vand.u32 %v189, 4294901760
        %v667 = vsub.f32 %v189, %v666
        %v668 = vand.u32 %v667, 4294901760
        %669 = vmatmul.mubr.f32.gmra.mxu0 %v668
        %v670 = vpop.f32.mrf.mxu0
        %v671 = vadd.f32 %v549, %v670
        %v672 = vpop.f32.mrf.mxu0
        %673 = vmatprep.mubr.f32.mxu0 0.0
        %v674 = vand.u32 %v192, 4294901760
        %v675 = vsub.f32 %v192, %v674
        %v676 = vand.u32 %v675, 4294901760
        %677 = vmatmul.mubr.f32.gmra.mxu0 %v676
        %v678 = vpop.f32.mrf.mxu0
        %v679 = vadd.f32 %v556, %v678
        %v680 = vpop.f32.mrf.mxu0
        %681 = vmatprep.mubr.f32.mxu0 0.0
        %v682 = vand.u32 %v195, 4294901760
        %v683 = vsub.f32 %v195, %v682
        %v684 = vand.u32 %v683, 4294901760
        %685 = vmatmul.mubr.f32.gmra.mxu0 %v684
        %v686 = vpop.f32.mrf.mxu0
        %v687 = vadd.f32 %v563, %v686
        %v688 = vpop.f32.mrf.mxu0
        %689 = vmatprep.mubr.f32.mxu0 0.0
        %v690 = vand.u32 %v198, 4294901760
        %v691 = vsub.f32 %v198, %v690
        %v692 = vand.u32 %v691, 4294901760
        %693 = vmatmul.mubr.f32.gmra.mxu0 %v692
        %v694 = vpop.f32.mrf.mxu0
        %v695 = vadd.f32 %v570, %v694
        %v696 = vpop.f32.mrf.mxu0
        %697 = vmatprep.mubr.f32.mxu0 0.0
        %v698 = vand.u32 %v201, 4294901760
        %v699 = vsub.f32 %v201, %v698
        %v700 = vand.u32 %v699, 4294901760
        %701 = vmatmul.mubr.f32.gmra.mxu0 %v700
        %v702 = vpop.f32.mrf.mxu0
        %v703 = vadd.f32 %v577, %v702
        %v704 = vpop.f32.mrf.mxu0
        %705 = vmatprep.mubr.f32.mxu0 0.0
        %v706 = vand.u32 %v204, 4294901760
        %v707 = vsub.f32 %v204, %v706
        %v708 = vand.u32 %v707, 4294901760
        %709 = vmatmul.mubr.f32.gmra.mxu0 %v708
        %v710 = vpop.f32.mrf.mxu0
        %v711 = vadd.f32 %v584, %v710
        %v712 = vpop.f32.mrf.mxu0
        %713 = vmatprep.mubr.f32.mxu0 0.0
        %v714 = vand.u32 %v207, 4294901760
        %v715 = vsub.f32 %v207, %v714
        %v716 = vand.u32 %v715, 4294901760
        %717 = vmatmul.mubr.f32.gmra.mxu0 %v716
        %v718 = vpop.f32.mrf.mxu0
        %v719 = vadd.f32 %v591, %v718
        %v720 = vpop.f32.mrf.mxu0
        %721 = vmatprep.mubr.f32.mxu0 0.0
        %v722 = vand.u32 %v210, 4294901760
        %v723 = vsub.f32 %v210, %v722
        %v724 = vand.u32 %v723, 4294901760
        %725 = vmatmul.mubr.f32.gmra.mxu0 %v724
        %v726 = vpop.f32.mrf.mxu0
        %v727 = vadd.f32 %v598, %v726
        %v728 = vpop.f32.mrf.mxu0
        %729 = vdwg.mxu0
        %730 = vmatprep.subr.mxu0 0.0
        %731 = vmatpush1.msra.mxu0 0.0
        %732 = vmatprep.subr.mxu0 0.0
        %733 = vmatpush1.msra.mxu0 0.0
        %734 = vmatprep.subr.mxu0 0.0
        %735 = vmatpush1.msra.mxu0 0.0
        %736 = vmatprep.subr.mxu0 0.0
        %737 = vmatpush1.msra.mxu0 0.0
        %738 = vmatprep.subr.mxu0 0.0
        %739 = vmatpush1.msra.mxu0 0.0
        %740 = vmatprep.subr.mxu0 0.0
        %741 = vmatpush1.msra.mxu0 0.0
        %742 = vmatprep.subr.mxu0 0.0
        %743 = vmatpush1.msra.mxu0 0.0
        %744 = vmatprep.subr.mxu0 0.0
        %745 = vmatpush1.msra.mxu0 0.0
        %746 = vmatprep.subr.mxu0 0.0
        %747 = vmatpush1.msra.mxu0 0.0
        %748 = vmatprep.subr.mxu0 0.0
        %749 = vmatpush1.msra.mxu0 0.0
        %750 = vmatprep.subr.mxu0 0.0
        %751 = vmatpush1.msra.mxu0 0.0
        %752 = vmatprep.subr.mxu0 0.0
        %753 = vmatpush1.msra.mxu0 0.0
        %754 = vmatprep.subr.mxu0 0.0
        %755 = vmatpush1.msra.mxu0 0.0
        %756 = vmatprep.subr.mxu0 0.0
        %757 = vmatpush1.msra.mxu0 0.0
        %758 = vmatprep.subr.mxu0 0.0
        %v759 = vsub.f32 %v166, %v166
        %v760 = vand.u32 %v759, 4294901760
        %761 = vmatpush1.msra.mxu0 %v760
        %762 = vmatprep.subr.mxu0 0.0
        %v763 = vsub.f32 %v165, %v165
        %v764 = vand.u32 %v763, 4294901760
        %765 = vmatpush1.msra.mxu0 %v764
        %766 = vmatprep.subr.mxu0 0.0
        %767 = vmatpush2.msra.mxu0 0.0
        %768 = vmatprep.subr.mxu0 0.0
        %769 = vmatpush2.msra.mxu0 0.0
        %770 = vmatprep.subr.mxu0 0.0
        %771 = vmatpush2.msra.mxu0 0.0
        %772 = vmatprep.subr.mxu0 0.0
        %773 = vmatpush2.msra.mxu0 0.0
        %774 = vmatprep.subr.mxu0 0.0
        %775 = vmatpush2.msra.mxu0 0.0
        %776 = vmatprep.subr.mxu0 0.0
        %777 = vmatpush2.msra.mxu0 0.0
        %778 = vmatprep.subr.mxu0 0.0
        %779 = vmatpush2.msra.mxu0 0.0
        %780 = vmatprep.subr.mxu0 0.0
        %781 = vmatpush2.msra.mxu0 0.0
        %782 = vmatprep.subr.mxu0 0.0
        %783 = vmatpush2.msra.mxu0 0.0
        %784 = vmatprep.subr.mxu0 0.0
        %785 = vmatpush2.msra.mxu0 0.0
        %786 = vmatprep.subr.mxu0 0.0
        %787 = vmatpush2.msra.mxu0 0.0
        %788 = vmatprep.subr.mxu0 0.0
        %789 = vmatpush2.msra.mxu0 0.0
        %790 = vmatprep.subr.mxu0 0.0
        %791 = vmatpush2.msra.mxu0 0.0
        %792 = vmatprep.subr.mxu0 0.0
        %793 = vmatpush2.msra.mxu0 0.0
        %794 = vmatprep.subr.mxu0 0.0
        %795 = vmatpush2.msra.mxu0 0.0
        %796 = vmatprep.subr.mxu0 0.0
        %797 = vmatpush2.msra.mxu0 0.0
        %798 = vmatprep.mubr.f32.mxu0 0.0
        %v799 = vand.u32 %v189, 4294901760
        %800 = vmatmul.mubr.f32.gmra.mxu0 %v799
        %v801 = vpop.f32.mrf.mxu0
        %v802 = vadd.f32 %v671, %v801
        %v803 = vpop.f32.mrf.mxu0
        %804 = vmatprep.mubr.f32.mxu0 0.0
        %v805 = vand.u32 %v192, 4294901760
        %806 = vmatmul.mubr.f32.gmra.mxu0 %v805
        %v807 = vpop.f32.mrf.mxu0
        %v808 = vadd.f32 %v679, %v807
        %v809 = vpop.f32.mrf.mxu0
        %810 = vmatprep.mubr.f32.mxu0 0.0
        %v811 = vand.u32 %v195, 4294901760
        %812 = vmatmul.mubr.f32.gmra.mxu0 %v811
        %v813 = vpop.f32.mrf.mxu0
        %v814 = vadd.f32 %v687, %v813
        %v815 = vpop.f32.mrf.mxu0
        %816 = vmatprep.mubr.f32.mxu0 0.0
        %v817 = vand.u32 %v198, 4294901760
        %818 = vmatmul.mubr.f32.gmra.mxu0 %v817
        %v819 = vpop.f32.mrf.mxu0
        %v820 = vadd.f32 %v695, %v819
        %v821 = vpop.f32.mrf.mxu0
        %822 = vmatprep.mubr.f32.mxu0 0.0
        %v823 = vand.u32 %v201, 4294901760
        %824 = vmatmul.mubr.f32.gmra.mxu0 %v823
        %v825 = vpop.f32.mrf.mxu0
        %v826 = vadd.f32 %v703, %v825
        %v827 = vpop.f32.mrf.mxu0
        %828 = vmatprep.mubr.f32.mxu0 0.0
        %v829 = vand.u32 %v204, 4294901760
        %830 = vmatmul.mubr.f32.gmra.mxu0 %v829
        %v831 = vpop.f32.mrf.mxu0
        %v832 = vadd.f32 %v711, %v831
        %v833 = vpop.f32.mrf.mxu0
        %834 = vmatprep.mubr.f32.mxu0 0.0
        %v835 = vand.u32 %v207, 4294901760
        %836 = vmatmul.mubr.f32.gmra.mxu0 %v835
        %v837 = vpop.f32.mrf.mxu0
        %v838 = vadd.f32 %v719, %v837
        %v839 = vpop.f32.mrf.mxu0
        %840 = vmatprep.mubr.f32.mxu0 0.0
        %v841 = vand.u32 %v210, 4294901760
        %842 = vmatmul.mubr.f32.gmra.mxu0 %v841
        %v843 = vpop.f32.mrf.mxu0
        %v844 = vadd.f32 %v727, %v843
        %v845 = vpop.f32.mrf.mxu0
        %846 = vdwg.mxu0
        %847 = vmatprep.subr.mxu0 0.0
        %848 = vmatpush1.msra.mxu0 0.0
        %849 = vmatprep.subr.mxu0 0.0
        %850 = vmatpush1.msra.mxu0 0.0
        %851 = vmatprep.subr.mxu0 0.0
        %852 = vmatpush1.msra.mxu0 0.0
        %853 = vmatprep.subr.mxu0 0.0
        %854 = vmatpush1.msra.mxu0 0.0
        %855 = vmatprep.subr.mxu0 0.0
        %856 = vmatpush1.msra.mxu0 0.0
        %857 = vmatprep.subr.mxu0 0.0
        %858 = vmatpush1.msra.mxu0 0.0
        %859 = vmatprep.subr.mxu0 0.0
        %860 = vmatpush1.msra.mxu0 0.0
        %861 = vmatprep.subr.mxu0 0.0
        %862 = vmatpush1.msra.mxu0 0.0
        %863 = vmatprep.subr.mxu0 0.0
        %864 = vmatpush1.msra.mxu0 0.0
        %865 = vmatprep.subr.mxu0 0.0
        %866 = vmatpush1.msra.mxu0 0.0
        %867 = vmatprep.subr.mxu0 0.0
        %868 = vmatpush1.msra.mxu0 0.0
        %869 = vmatprep.subr.mxu0 0.0
        %870 = vmatpush1.msra.mxu0 0.0
        %871 = vmatprep.subr.mxu0 0.0
        %872 = vmatpush1.msra.mxu0 0.0
        %873 = vmatprep.subr.mxu0 0.0
        %874 = vmatpush1.msra.mxu0 0.0
        %875 = vmatprep.subr.mxu0 0.0
        %876 = vmatpush1.msra.mxu0 %v166
        %877 = vmatprep.subr.mxu0 0.0
        %878 = vmatpush1.msra.mxu0 %v165
        %879 = vmatprep.subr.mxu0 0.0
        %880 = vmatpush2.msra.mxu0 0.0
        %881 = vmatprep.subr.mxu0 0.0
        %882 = vmatpush2.msra.mxu0 0.0
        %883 = vmatprep.subr.mxu0 0.0
        %884 = vmatpush2.msra.mxu0 0.0
        %885 = vmatprep.subr.mxu0 0.0
        %886 = vmatpush2.msra.mxu0 0.0
        %887 = vmatprep.subr.mxu0 0.0
        %888 = vmatpush2.msra.mxu0 0.0
        %889 = vmatprep.subr.mxu0 0.0
        %890 = vmatpush2.msra.mxu0 0.0
        %891 = vmatprep.subr.mxu0 0.0
        %892 = vmatpush2.msra.mxu0 0.0
        %893 = vmatprep.subr.mxu0 0.0
        %894 = vmatpush2.msra.mxu0 0.0
        %895 = vmatprep.subr.mxu0 0.0
        %896 = vmatpush2.msra.mxu0 0.0
        %897 = vmatprep.subr.mxu0 0.0
        %898 = vmatpush2.msra.mxu0 0.0
        %899 = vmatprep.subr.mxu0 0.0
        %900 = vmatpush2.msra.mxu0 0.0
        %901 = vmatprep.subr.mxu0 0.0
        %902 = vmatpush2.msra.mxu0 0.0
        %903 = vmatprep.subr.mxu0 0.0
        %904 = vmatpush2.msra.mxu0 0.0
        %905 = vmatprep.subr.mxu0 0.0
        %906 = vmatpush2.msra.mxu0 0.0
        %907 = vmatprep.subr.mxu0 0.0
        %908 = vmatpush2.msra.mxu0 0.0
        %909 = vmatprep.subr.mxu0 0.0
        %910 = vmatpush2.msra.mxu0 0.0
        %911 = vmatprep.mubr.f32.mxu0 0.0
        %v912 = vand.u32 %v189, 4294901760
        %913 = vmatmul.mubr.f32.gmra.mxu0 %v912
        %v914 = vpop.f32.mrf.mxu0
        %v915 = vadd.f32 %v802, %v914
        %v916 = vpop.f32.mrf.mxu0
        %917 = vmatprep.mubr.f32.mxu0 0.0
        %v918 = vand.u32 %v192, 4294901760
        %919 = vmatmul.mubr.f32.gmra.mxu0 %v918
        %v920 = vpop.f32.mrf.mxu0
        %v921 = vadd.f32 %v808, %v920
        %v922 = vpop.f32.mrf.mxu0
        %923 = vmatprep.mubr.f32.mxu0 0.0
        %v924 = vand.u32 %v195, 4294901760
        %925 = vmatmul.mubr.f32.gmra.mxu0 %v924
        %v926 = vpop.f32.mrf.mxu0
        %v927 = vadd.f32 %v814, %v926
        %v928 = vpop.f32.mrf.mxu0
        %929 = vmatprep.mubr.f32.mxu0 0.0
        %v930 = vand.u32 %v198, 4294901760
        %931 = vmatmul.mubr.f32.gmra.mxu0 %v930
        %v932 = vpop.f32.mrf.mxu0
        %v933 = vadd.f32 %v820, %v932
        %v934 = vpop.f32.mrf.mxu0
        %935 = vmatprep.mubr.f32.mxu0 0.0
        %v936 = vand.u32 %v201, 4294901760
        %937 = vmatmul.mubr.f32.gmra.mxu0 %v936
        %v938 = vpop.f32.mrf.mxu0
        %v939 = vadd.f32 %v826, %v938
        %v940 = vpop.f32.mrf.mxu0
        %941 = vmatprep.mubr.f32.mxu0 0.0
        %v942 = vand.u32 %v204, 4294901760
        %943 = vmatmul.mubr.f32.gmra.mxu0 %v942
        %v944 = vpop.f32.mrf.mxu0
        %v945 = vadd.f32 %v832, %v944
        %v946 = vpop.f32.mrf.mxu0
        %947 = vmatprep.mubr.f32.mxu0 0.0
        %v948 = vand.u32 %v207, 4294901760
        %949 = vmatmul.mubr.f32.gmra.mxu0 %v948
        %v950 = vpop.f32.mrf.mxu0
        %v951 = vadd.f32 %v838, %v950
        %v952 = vpop.f32.mrf.mxu0
        %953 = vmatprep.mubr.f32.mxu0 0.0
        %v954 = vand.u32 %v210, 4294901760
        %955 = vmatmul.mubr.f32.gmra.mxu0 %v954
        %v956 = vpop.f32.mrf.mxu0
        %v957 = vadd.f32 %v844, %v956
        %v958 = vpop.f32.mrf.mxu0
        %959 = vdwg.mxu0
        %v960 = vrot.slane %v915, 7
        %v961 = vrot.slane %v927, 7
        %v962 = vrot.slane %v939, 7
        %v963 = vrot.slane %v951, 7
        %v964 = vrot.slane %v921, 7
        %v965 = vrot.slane %v933, 7
        %v966 = vrot.slane %v945, 7
        %v967 = vrot.slane %v957, 7
        %vm968 = vcmp.lt.s32.totalorder %v147, 1
        %v969 = vsel %vm968, %v960, %v964
        %v970 = vsel %vm968, %v961, %v965
        %v971 = vsel %vm968, %v962, %v966
        %v972 = vsel %vm968, %v963, %v967
        %v973 = vsel %vm968, %v964, %v960
        %v974 = vsel %vm968, %v965, %v961
        %v975 = vsel %vm968, %v966, %v962
        %v976 = vsel %vm968, %v967, %v963
        %v977 = vsel %vm151, 1, 0
        %v978 = vsel %vm152, 1, 0
        %vm979 = vcmp.eq.s32.totalorder %v977, 1
        %vm980 = vcmp.eq.s32.totalorder %v978, 1
        %v981 = vsel %vm979, %v973, 0.0
        %v982 = vsel %vm980, %v969, 0.0
        %v983 = vsel %vm979, %v974, 0.0
        %v984 = vsel %vm980, %v970, 0.0
        %v985 = vsel %vm979, %v975, 0.0
        %v986 = vsel %vm980, %v971, 0.0
        %v987 = vsel %vm979, %v976, 0.0
        %v988 = vsel %vm980, %v972, 0.0
        %v989 = vadd.f32 %v981, %v915
        %v990 = vadd.f32 %v982, %v921
        %v991 = vadd.f32 %v983, %v927
        %v992 = vadd.f32 %v984, %v933
        %v993 = vadd.f32 %v985, %v939
        %v994 = vadd.f32 %v986, %v945
        %v995 = vadd.f32 %v987, %v951
        %v996 = vadd.f32 %v988, %v957
        %v997 = vrot.slane %v915, 1
        %v998 = vrot.slane %v927, 1
        %v999 = vrot.slane %v939, 1
        %v1000 = vrot.slane %v951, 1
        %v1001 = vrot.slane %v921, 1
        %v1002 = vrot.slane %v933, 1
        %v1003 = vrot.slane %v945, 1
        %v1004 = vrot.slane %v957, 1
        %vm1005 = vcmp.lt.s32.totalorder %v147, 7
        %v1006 = vsel %vm1005, %v997, %v1001
        %v1007 = vsel %vm1005, %v998, %v1002
        %v1008 = vsel %vm1005, %v999, %v1003
        %v1009 = vsel %vm1005, %v1000, %v1004
        %v1010 = vsel %vm1005, %v1001, %v997
        %v1011 = vsel %vm1005, %v1002, %v998
        %v1012 = vsel %vm1005, %v1003, %v999
        %v1013 = vsel %vm1005, %v1004, %v1000
        %v1014 = vsel %vm149, 1, 0
        %v1015 = vsel %vm150, 1, 0
        %vm1016 = vcmp.eq.s32.totalorder %v1014, 1
        %vm1017 = vcmp.eq.s32.totalorder %v1015, 1
        %v1018 = vsel %vm1016, %v1006, 0.0
        %v1019 = vsel %vm1017, %v1010, 0.0
        %v1020 = vsel %vm1016, %v1007, 0.0
        %v1021 = vsel %vm1017, %v1011, 0.0
        %v1022 = vsel %vm1016, %v1008, 0.0
        %v1023 = vsel %vm1017, %v1012, 0.0
        %v1024 = vsel %vm1016, %v1009, 0.0
        %v1025 = vsel %vm1017, %v1013, 0.0
        %v1026 = vadd.f32 %v989, %v1018
        %v1027 = vadd.f32 %v990, %v1019
        %v1028 = vadd.f32 %v991, %v1020
        %v1029 = vadd.f32 %v992, %v1021
        %v1030 = vadd.f32 %v993, %v1022
        %v1031 = vadd.f32 %v994, %v1023
        %v1032 = vadd.f32 %v995, %v1024
        %v1033 = vadd.f32 %v996, %v1025
        %v1034 = vmul.f32 %v1026, 0.11111111
        %v1035 = vmul.f32 %v1027, 0.11111111
        %v1036 = vmul.f32 %v1028, 0.11111111
        %v1037 = vmul.f32 %v1029, 0.11111111
        %v1038 = vmul.f32 %v1030, 0.11111111
        %v1039 = vmul.f32 %v1031, 0.11111111
        %v1040 = vmul.f32 %v1032, 0.11111111
        %v1041 = vmul.f32 %v1033, 0.11111111
        %v1043 = vsel %vm187, %v1034, 0
        %v1046 = vsel %vm187, %v1035, 0
        %v1049 = vsel %vm187, %v1036, 0
        %v1052 = vsel %vm187, %v1037, 0
        %v1055 = vsel %vm187, %v1038, 0
        %v1058 = vsel %vm187, %v1039, 0
        %v1061 = vsel %vm187, %v1040, 0
        %v1064 = vsel %vm187, %v1041, 0
        %1066 = vmatprep.subr.mxu0 0.0
        %1067 = vmatpush1.msra.mxu0 0.0
        %1068 = vmatprep.subr.mxu0 0.0
        %1069 = vmatpush1.msra.mxu0 0.0
        %1070 = vmatprep.subr.mxu0 0.0
        %1071 = vmatpush1.msra.mxu0 0.0
        %1072 = vmatprep.subr.mxu0 0.0
        %1073 = vmatpush1.msra.mxu0 0.0
        %1074 = vmatprep.subr.mxu0 0.0
        %1075 = vmatpush1.msra.mxu0 0.0
        %1076 = vmatprep.subr.mxu0 0.0
        %1077 = vmatpush1.msra.mxu0 0.0
        %1078 = vmatprep.subr.mxu0 0.0
        %1079 = vmatpush1.msra.mxu0 0.0
        %1080 = vmatprep.subr.mxu0 0.0
        %1081 = vmatpush1.msra.mxu0 0.0
        %1082 = vmatprep.subr.mxu0 0.0
        %1083 = vmatpush1.msra.mxu0 0.0
        %1084 = vmatprep.subr.mxu0 0.0
        %1085 = vmatpush1.msra.mxu0 0.0
        %1086 = vmatprep.subr.mxu0 0.0
        %1087 = vmatpush1.msra.mxu0 0.0
        %1088 = vmatprep.subr.mxu0 0.0
        %1089 = vmatpush1.msra.mxu0 0.0
        %1090 = vmatprep.subr.mxu0 0.0
        %1091 = vmatpush1.msra.mxu0 0.0
        %1092 = vmatprep.subr.mxu0 0.0
        %1093 = vmatpush1.msra.mxu0 0.0
        %1094 = vmatprep.subr.mxu0 0.0
        %v1095 = vand.u32 %v176, 4294901760
        %1096 = vmatpush1.msra.mxu0 %v1095
        %1097 = vmatprep.subr.mxu0 0.0
        %v1098 = vand.u32 %v175, 4294901760
        %1099 = vmatpush1.msra.mxu0 %v1098
        %1100 = vmatprep.subr.mxu0 0.0
        %1101 = vmatpush2.msra.mxu0 0.0
        %1102 = vmatprep.subr.mxu0 0.0
        %1103 = vmatpush2.msra.mxu0 0.0
        %1104 = vmatprep.subr.mxu0 0.0
        %1105 = vmatpush2.msra.mxu0 0.0
        %1106 = vmatprep.subr.mxu0 0.0
        %1107 = vmatpush2.msra.mxu0 0.0
        %1108 = vmatprep.subr.mxu0 0.0
        %1109 = vmatpush2.msra.mxu0 0.0
        %1110 = vmatprep.subr.mxu0 0.0
        %1111 = vmatpush2.msra.mxu0 0.0
        %1112 = vmatprep.subr.mxu0 0.0
        %1113 = vmatpush2.msra.mxu0 0.0
        %1114 = vmatprep.subr.mxu0 0.0
        %1115 = vmatpush2.msra.mxu0 0.0
        %1116 = vmatprep.subr.mxu0 0.0
        %1117 = vmatpush2.msra.mxu0 0.0
        %1118 = vmatprep.subr.mxu0 0.0
        %1119 = vmatpush2.msra.mxu0 0.0
        %1120 = vmatprep.subr.mxu0 0.0
        %1121 = vmatpush2.msra.mxu0 0.0
        %1122 = vmatprep.subr.mxu0 0.0
        %1123 = vmatpush2.msra.mxu0 0.0
        %1124 = vmatprep.subr.mxu0 0.0
        %1125 = vmatpush2.msra.mxu0 0.0
        %1126 = vmatprep.subr.mxu0 0.0
        %1127 = vmatpush2.msra.mxu0 0.0
        %1128 = vmatprep.subr.mxu0 0.0
        %1129 = vmatpush2.msra.mxu0 0.0
        %1130 = vmatprep.subr.mxu0 0.0
        %1131 = vmatpush2.msra.mxu0 0.0
        %1132 = vmatprep.mubr.f32.mxu0 0.0
        %v1133 = vand.u32 %v1043, 4294901760
        %v1134 = vsub.f32 %v1043, %v1133
        %v1135 = vand.u32 %v1134, 4294901760
        %v1136 = vsub.f32 %v1134, %v1135
        %v1137 = vand.u32 %v1136, 4294901760
        %1138 = vmatmul.mubr.f32.gmra.mxu0 %v1137
        %v1139 = vpop.f32.mrf.mxu0
        %v1140 = vadd.f32 0.0, %v1139
        %v1141 = vpop.f32.mrf.mxu0
        %1142 = vmatprep.mubr.f32.mxu0 0.0
        %v1143 = vand.u32 %v1046, 4294901760
        %v1144 = vsub.f32 %v1046, %v1143
        %v1145 = vand.u32 %v1144, 4294901760
        %v1146 = vsub.f32 %v1144, %v1145
        %v1147 = vand.u32 %v1146, 4294901760
        %1148 = vmatmul.mubr.f32.gmra.mxu0 %v1147
        %v1149 = vpop.f32.mrf.mxu0
        %v1150 = vadd.f32 0.0, %v1149
        %v1151 = vpop.f32.mrf.mxu0
        %1152 = vmatprep.mubr.f32.mxu0 0.0
        %v1153 = vand.u32 %v1049, 4294901760
        %v1154 = vsub.f32 %v1049, %v1153
        %v1155 = vand.u32 %v1154, 4294901760
        %v1156 = vsub.f32 %v1154, %v1155
        %v1157 = vand.u32 %v1156, 4294901760
        %1158 = vmatmul.mubr.f32.gmra.mxu0 %v1157
        %v1159 = vpop.f32.mrf.mxu0
        %v1160 = vadd.f32 0.0, %v1159
        %v1161 = vpop.f32.mrf.mxu0
        %1162 = vmatprep.mubr.f32.mxu0 0.0
        %v1163 = vand.u32 %v1052, 4294901760
        %v1164 = vsub.f32 %v1052, %v1163
        %v1165 = vand.u32 %v1164, 4294901760
        %v1166 = vsub.f32 %v1164, %v1165
        %v1167 = vand.u32 %v1166, 4294901760
        %1168 = vmatmul.mubr.f32.gmra.mxu0 %v1167
        %v1169 = vpop.f32.mrf.mxu0
        %v1170 = vadd.f32 0.0, %v1169
        %v1171 = vpop.f32.mrf.mxu0
        %1172 = vmatprep.mubr.f32.mxu0 0.0
        %v1173 = vand.u32 %v1055, 4294901760
        %v1174 = vsub.f32 %v1055, %v1173
        %v1175 = vand.u32 %v1174, 4294901760
        %v1176 = vsub.f32 %v1174, %v1175
        %v1177 = vand.u32 %v1176, 4294901760
        %1178 = vmatmul.mubr.f32.gmra.mxu0 %v1177
        %v1179 = vpop.f32.mrf.mxu0
        %v1180 = vadd.f32 0.0, %v1179
        %v1181 = vpop.f32.mrf.mxu0
        %1182 = vmatprep.mubr.f32.mxu0 0.0
        %v1183 = vand.u32 %v1058, 4294901760
        %v1184 = vsub.f32 %v1058, %v1183
        %v1185 = vand.u32 %v1184, 4294901760
        %v1186 = vsub.f32 %v1184, %v1185
        %v1187 = vand.u32 %v1186, 4294901760
        %1188 = vmatmul.mubr.f32.gmra.mxu0 %v1187
        %v1189 = vpop.f32.mrf.mxu0
        %v1190 = vadd.f32 0.0, %v1189
        %v1191 = vpop.f32.mrf.mxu0
        %1192 = vmatprep.mubr.f32.mxu0 0.0
        %v1193 = vand.u32 %v1061, 4294901760
        %v1194 = vsub.f32 %v1061, %v1193
        %v1195 = vand.u32 %v1194, 4294901760
        %v1196 = vsub.f32 %v1194, %v1195
        %v1197 = vand.u32 %v1196, 4294901760
        %1198 = vmatmul.mubr.f32.gmra.mxu0 %v1197
        %v1199 = vpop.f32.mrf.mxu0
        %v1200 = vadd.f32 0.0, %v1199
        %v1201 = vpop.f32.mrf.mxu0
        %1202 = vmatprep.mubr.f32.mxu0 0.0
        %v1203 = vand.u32 %v1064, 4294901760
        %v1204 = vsub.f32 %v1064, %v1203
        %v1205 = vand.u32 %v1204, 4294901760
        %v1206 = vsub.f32 %v1204, %v1205
        %v1207 = vand.u32 %v1206, 4294901760
        %1208 = vmatmul.mubr.f32.gmra.mxu0 %v1207
        %v1209 = vpop.f32.mrf.mxu0
        %v1210 = vadd.f32 0.0, %v1209
        %v1211 = vpop.f32.mrf.mxu0
        %1212 = vdwg.mxu0
        %1213 = vmatprep.subr.mxu0 0.0
        %1214 = vmatpush1.msra.mxu0 0.0
        %1215 = vmatprep.subr.mxu0 0.0
        %1216 = vmatpush1.msra.mxu0 0.0
        %1217 = vmatprep.subr.mxu0 0.0
        %1218 = vmatpush1.msra.mxu0 0.0
        %1219 = vmatprep.subr.mxu0 0.0
        %1220 = vmatpush1.msra.mxu0 0.0
        %1221 = vmatprep.subr.mxu0 0.0
        %1222 = vmatpush1.msra.mxu0 0.0
        %1223 = vmatprep.subr.mxu0 0.0
        %1224 = vmatpush1.msra.mxu0 0.0
        %1225 = vmatprep.subr.mxu0 0.0
        %1226 = vmatpush1.msra.mxu0 0.0
        %1227 = vmatprep.subr.mxu0 0.0
        %1228 = vmatpush1.msra.mxu0 0.0
        %1229 = vmatprep.subr.mxu0 0.0
        %1230 = vmatpush1.msra.mxu0 0.0
        %1231 = vmatprep.subr.mxu0 0.0
        %1232 = vmatpush1.msra.mxu0 0.0
        %1233 = vmatprep.subr.mxu0 0.0
        %1234 = vmatpush1.msra.mxu0 0.0
        %1235 = vmatprep.subr.mxu0 0.0
        %1236 = vmatpush1.msra.mxu0 0.0
        %1237 = vmatprep.subr.mxu0 0.0
        %1238 = vmatpush1.msra.mxu0 0.0
        %1239 = vmatprep.subr.mxu0 0.0
        %1240 = vmatpush1.msra.mxu0 0.0
        %1241 = vmatprep.subr.mxu0 0.0
        %v1242 = vand.u32 %v176, 4294901760
        %v1243 = vsub.f32 %v176, %v1242
        %v1244 = vand.u32 %v1243, 4294901760
        %v1245 = vsub.f32 %v1243, %v1244
        %v1246 = vand.u32 %v1245, 4294901760
        %1247 = vmatpush1.msra.mxu0 %v1246
        %1248 = vmatprep.subr.mxu0 0.0
        %v1249 = vand.u32 %v175, 4294901760
        %v1250 = vsub.f32 %v175, %v1249
        %v1251 = vand.u32 %v1250, 4294901760
        %v1252 = vsub.f32 %v1250, %v1251
        %v1253 = vand.u32 %v1252, 4294901760
        %1254 = vmatpush1.msra.mxu0 %v1253
        %1255 = vmatprep.subr.mxu0 0.0
        %1256 = vmatpush2.msra.mxu0 0.0
        %1257 = vmatprep.subr.mxu0 0.0
        %1258 = vmatpush2.msra.mxu0 0.0
        %1259 = vmatprep.subr.mxu0 0.0
        %1260 = vmatpush2.msra.mxu0 0.0
        %1261 = vmatprep.subr.mxu0 0.0
        %1262 = vmatpush2.msra.mxu0 0.0
        %1263 = vmatprep.subr.mxu0 0.0
        %1264 = vmatpush2.msra.mxu0 0.0
        %1265 = vmatprep.subr.mxu0 0.0
        %1266 = vmatpush2.msra.mxu0 0.0
        %1267 = vmatprep.subr.mxu0 0.0
        %1268 = vmatpush2.msra.mxu0 0.0
        %1269 = vmatprep.subr.mxu0 0.0
        %1270 = vmatpush2.msra.mxu0 0.0
        %1271 = vmatprep.subr.mxu0 0.0
        %1272 = vmatpush2.msra.mxu0 0.0
        %1273 = vmatprep.subr.mxu0 0.0
        %1274 = vmatpush2.msra.mxu0 0.0
        %1275 = vmatprep.subr.mxu0 0.0
        %1276 = vmatpush2.msra.mxu0 0.0
        %1277 = vmatprep.subr.mxu0 0.0
        %1278 = vmatpush2.msra.mxu0 0.0
        %1279 = vmatprep.subr.mxu0 0.0
        %1280 = vmatpush2.msra.mxu0 0.0
        %1281 = vmatprep.subr.mxu0 0.0
        %1282 = vmatpush2.msra.mxu0 0.0
        %1283 = vmatprep.subr.mxu0 0.0
        %1284 = vmatpush2.msra.mxu0 0.0
        %1285 = vmatprep.subr.mxu0 0.0
        %1286 = vmatpush2.msra.mxu0 0.0
        %1287 = vmatprep.mubr.f32.mxu0 0.0
        %v1288 = vand.u32 %v1043, 4294901760
        %1289 = vmatmul.mubr.f32.gmra.mxu0 %v1288
        %v1290 = vpop.f32.mrf.mxu0
        %v1291 = vadd.f32 %v1140, %v1290
        %v1292 = vpop.f32.mrf.mxu0
        %1293 = vmatprep.mubr.f32.mxu0 0.0
        %v1294 = vand.u32 %v1046, 4294901760
        %1295 = vmatmul.mubr.f32.gmra.mxu0 %v1294
        %v1296 = vpop.f32.mrf.mxu0
        %v1297 = vadd.f32 %v1150, %v1296
        %v1298 = vpop.f32.mrf.mxu0
        %1299 = vmatprep.mubr.f32.mxu0 0.0
        %v1300 = vand.u32 %v1049, 4294901760
        %1301 = vmatmul.mubr.f32.gmra.mxu0 %v1300
        %v1302 = vpop.f32.mrf.mxu0
        %v1303 = vadd.f32 %v1160, %v1302
        %v1304 = vpop.f32.mrf.mxu0
        %1305 = vmatprep.mubr.f32.mxu0 0.0
        %v1306 = vand.u32 %v1052, 4294901760
        %1307 = vmatmul.mubr.f32.gmra.mxu0 %v1306
        %v1308 = vpop.f32.mrf.mxu0
        %v1309 = vadd.f32 %v1170, %v1308
        %v1310 = vpop.f32.mrf.mxu0
        %1311 = vmatprep.mubr.f32.mxu0 0.0
        %v1312 = vand.u32 %v1055, 4294901760
        %1313 = vmatmul.mubr.f32.gmra.mxu0 %v1312
        %v1314 = vpop.f32.mrf.mxu0
        %v1315 = vadd.f32 %v1180, %v1314
        %v1316 = vpop.f32.mrf.mxu0
        %1317 = vmatprep.mubr.f32.mxu0 0.0
        %v1318 = vand.u32 %v1058, 4294901760
        %1319 = vmatmul.mubr.f32.gmra.mxu0 %v1318
        %v1320 = vpop.f32.mrf.mxu0
        %v1321 = vadd.f32 %v1190, %v1320
        %v1322 = vpop.f32.mrf.mxu0
        %1323 = vmatprep.mubr.f32.mxu0 0.0
        %v1324 = vand.u32 %v1061, 4294901760
        %1325 = vmatmul.mubr.f32.gmra.mxu0 %v1324
        %v1326 = vpop.f32.mrf.mxu0
        %v1327 = vadd.f32 %v1200, %v1326
        %v1328 = vpop.f32.mrf.mxu0
        %1329 = vmatprep.mubr.f32.mxu0 0.0
        %v1330 = vand.u32 %v1064, 4294901760
        %1331 = vmatmul.mubr.f32.gmra.mxu0 %v1330
        %v1332 = vpop.f32.mrf.mxu0
        %v1333 = vadd.f32 %v1210, %v1332
        %v1334 = vpop.f32.mrf.mxu0
        %1335 = vdwg.mxu0
        %1336 = vmatprep.subr.mxu0 0.0
        %1337 = vmatpush1.msra.mxu0 0.0
        %1338 = vmatprep.subr.mxu0 0.0
        %1339 = vmatpush1.msra.mxu0 0.0
        %1340 = vmatprep.subr.mxu0 0.0
        %1341 = vmatpush1.msra.mxu0 0.0
        %1342 = vmatprep.subr.mxu0 0.0
        %1343 = vmatpush1.msra.mxu0 0.0
        %1344 = vmatprep.subr.mxu0 0.0
        %1345 = vmatpush1.msra.mxu0 0.0
        %1346 = vmatprep.subr.mxu0 0.0
        %1347 = vmatpush1.msra.mxu0 0.0
        %1348 = vmatprep.subr.mxu0 0.0
        %1349 = vmatpush1.msra.mxu0 0.0
        %1350 = vmatprep.subr.mxu0 0.0
        %1351 = vmatpush1.msra.mxu0 0.0
        %1352 = vmatprep.subr.mxu0 0.0
        %1353 = vmatpush1.msra.mxu0 0.0
        %1354 = vmatprep.subr.mxu0 0.0
        %1355 = vmatpush1.msra.mxu0 0.0
        %1356 = vmatprep.subr.mxu0 0.0
        %1357 = vmatpush1.msra.mxu0 0.0
        %1358 = vmatprep.subr.mxu0 0.0
        %1359 = vmatpush1.msra.mxu0 0.0
        %1360 = vmatprep.subr.mxu0 0.0
        %1361 = vmatpush1.msra.mxu0 0.0
        %1362 = vmatprep.subr.mxu0 0.0
        %1363 = vmatpush1.msra.mxu0 0.0
        %1364 = vmatprep.subr.mxu0 0.0
        %v1365 = vand.u32 %v176, 4294901760
        %v1366 = vsub.f32 %v176, %v1365
        %1367 = vmatpush1.msra.mxu0 %v1366
        %1368 = vmatprep.subr.mxu0 0.0
        %v1369 = vand.u32 %v175, 4294901760
        %v1370 = vsub.f32 %v175, %v1369
        %1371 = vmatpush1.msra.mxu0 %v1370
        %1372 = vmatprep.subr.mxu0 0.0
        %1373 = vmatpush2.msra.mxu0 0.0
        %1374 = vmatprep.subr.mxu0 0.0
        %1375 = vmatpush2.msra.mxu0 0.0
        %1376 = vmatprep.subr.mxu0 0.0
        %1377 = vmatpush2.msra.mxu0 0.0
        %1378 = vmatprep.subr.mxu0 0.0
        %1379 = vmatpush2.msra.mxu0 0.0
        %1380 = vmatprep.subr.mxu0 0.0
        %1381 = vmatpush2.msra.mxu0 0.0
        %1382 = vmatprep.subr.mxu0 0.0
        %1383 = vmatpush2.msra.mxu0 0.0
        %1384 = vmatprep.subr.mxu0 0.0
        %1385 = vmatpush2.msra.mxu0 0.0
        %1386 = vmatprep.subr.mxu0 0.0
        %1387 = vmatpush2.msra.mxu0 0.0
        %1388 = vmatprep.subr.mxu0 0.0
        %1389 = vmatpush2.msra.mxu0 0.0
        %1390 = vmatprep.subr.mxu0 0.0
        %1391 = vmatpush2.msra.mxu0 0.0
        %1392 = vmatprep.subr.mxu0 0.0
        %1393 = vmatpush2.msra.mxu0 0.0
        %1394 = vmatprep.subr.mxu0 0.0
        %1395 = vmatpush2.msra.mxu0 0.0
        %1396 = vmatprep.subr.mxu0 0.0
        %1397 = vmatpush2.msra.mxu0 0.0
        %1398 = vmatprep.subr.mxu0 0.0
        %1399 = vmatpush2.msra.mxu0 0.0
        %1400 = vmatprep.subr.mxu0 0.0
        %1401 = vmatpush2.msra.mxu0 0.0
        %1402 = vmatprep.subr.mxu0 0.0
        %1403 = vmatpush2.msra.mxu0 0.0
        %1404 = vmatprep.mubr.f32.mxu0 0.0
        %v1405 = vand.u32 %v1043, 4294901760
        %v1406 = vsub.f32 %v1043, %v1405
        %1407 = vmatmul.mubr.f32.gmra.mxu0 %v1406
        %v1408 = vpop.f32.mrf.mxu0
        %v1409 = vadd.f32 %v1291, %v1408
        %v1410 = vpop.f32.mrf.mxu0
        %1411 = vmatprep.mubr.f32.mxu0 0.0
        %v1412 = vand.u32 %v1046, 4294901760
        %v1413 = vsub.f32 %v1046, %v1412
        %1414 = vmatmul.mubr.f32.gmra.mxu0 %v1413
        %v1415 = vpop.f32.mrf.mxu0
        %v1416 = vadd.f32 %v1297, %v1415
        %v1417 = vpop.f32.mrf.mxu0
        %1418 = vmatprep.mubr.f32.mxu0 0.0
        %v1419 = vand.u32 %v1049, 4294901760
        %v1420 = vsub.f32 %v1049, %v1419
        %1421 = vmatmul.mubr.f32.gmra.mxu0 %v1420
        %v1422 = vpop.f32.mrf.mxu0
        %v1423 = vadd.f32 %v1303, %v1422
        %v1424 = vpop.f32.mrf.mxu0
        %1425 = vmatprep.mubr.f32.mxu0 0.0
        %v1426 = vand.u32 %v1052, 4294901760
        %v1427 = vsub.f32 %v1052, %v1426
        %1428 = vmatmul.mubr.f32.gmra.mxu0 %v1427
        %v1429 = vpop.f32.mrf.mxu0
        %v1430 = vadd.f32 %v1309, %v1429
        %v1431 = vpop.f32.mrf.mxu0
        %1432 = vmatprep.mubr.f32.mxu0 0.0
        %v1433 = vand.u32 %v1055, 4294901760
        %v1434 = vsub.f32 %v1055, %v1433
        %1435 = vmatmul.mubr.f32.gmra.mxu0 %v1434
        %v1436 = vpop.f32.mrf.mxu0
        %v1437 = vadd.f32 %v1315, %v1436
        %v1438 = vpop.f32.mrf.mxu0
        %1439 = vmatprep.mubr.f32.mxu0 0.0
        %v1440 = vand.u32 %v1058, 4294901760
        %v1441 = vsub.f32 %v1058, %v1440
        %1442 = vmatmul.mubr.f32.gmra.mxu0 %v1441
        %v1443 = vpop.f32.mrf.mxu0
        %v1444 = vadd.f32 %v1321, %v1443
        %v1445 = vpop.f32.mrf.mxu0
        %1446 = vmatprep.mubr.f32.mxu0 0.0
        %v1447 = vand.u32 %v1061, 4294901760
        %v1448 = vsub.f32 %v1061, %v1447
        %1449 = vmatmul.mubr.f32.gmra.mxu0 %v1448
        %v1450 = vpop.f32.mrf.mxu0
        %v1451 = vadd.f32 %v1327, %v1450
        %v1452 = vpop.f32.mrf.mxu0
        %1453 = vmatprep.mubr.f32.mxu0 0.0
        %v1454 = vand.u32 %v1064, 4294901760
        %v1455 = vsub.f32 %v1064, %v1454
        %1456 = vmatmul.mubr.f32.gmra.mxu0 %v1455
        %v1457 = vpop.f32.mrf.mxu0
        %v1458 = vadd.f32 %v1333, %v1457
        %v1459 = vpop.f32.mrf.mxu0
        %1460 = vdwg.mxu0
        %1461 = vmatprep.subr.mxu0 0.0
        %1462 = vmatpush1.msra.mxu0 0.0
        %1463 = vmatprep.subr.mxu0 0.0
        %1464 = vmatpush1.msra.mxu0 0.0
        %1465 = vmatprep.subr.mxu0 0.0
        %1466 = vmatpush1.msra.mxu0 0.0
        %1467 = vmatprep.subr.mxu0 0.0
        %1468 = vmatpush1.msra.mxu0 0.0
        %1469 = vmatprep.subr.mxu0 0.0
        %1470 = vmatpush1.msra.mxu0 0.0
        %1471 = vmatprep.subr.mxu0 0.0
        %1472 = vmatpush1.msra.mxu0 0.0
        %1473 = vmatprep.subr.mxu0 0.0
        %1474 = vmatpush1.msra.mxu0 0.0
        %1475 = vmatprep.subr.mxu0 0.0
        %1476 = vmatpush1.msra.mxu0 0.0
        %1477 = vmatprep.subr.mxu0 0.0
        %1478 = vmatpush1.msra.mxu0 0.0
        %1479 = vmatprep.subr.mxu0 0.0
        %1480 = vmatpush1.msra.mxu0 0.0
        %1481 = vmatprep.subr.mxu0 0.0
        %1482 = vmatpush1.msra.mxu0 0.0
        %1483 = vmatprep.subr.mxu0 0.0
        %1484 = vmatpush1.msra.mxu0 0.0
        %1485 = vmatprep.subr.mxu0 0.0
        %1486 = vmatpush1.msra.mxu0 0.0
        %1487 = vmatprep.subr.mxu0 0.0
        %1488 = vmatpush1.msra.mxu0 0.0
        %1489 = vmatprep.subr.mxu0 0.0
        %v1490 = vand.u32 %v176, 4294901760
        %1491 = vmatpush1.msra.mxu0 %v1490
        %1492 = vmatprep.subr.mxu0 0.0
        %v1493 = vand.u32 %v175, 4294901760
        %1494 = vmatpush1.msra.mxu0 %v1493
        %1495 = vmatprep.subr.mxu0 0.0
        %1496 = vmatpush2.msra.mxu0 0.0
        %1497 = vmatprep.subr.mxu0 0.0
        %1498 = vmatpush2.msra.mxu0 0.0
        %1499 = vmatprep.subr.mxu0 0.0
        %1500 = vmatpush2.msra.mxu0 0.0
        %1501 = vmatprep.subr.mxu0 0.0
        %1502 = vmatpush2.msra.mxu0 0.0
        %1503 = vmatprep.subr.mxu0 0.0
        %1504 = vmatpush2.msra.mxu0 0.0
        %1505 = vmatprep.subr.mxu0 0.0
        %1506 = vmatpush2.msra.mxu0 0.0
        %1507 = vmatprep.subr.mxu0 0.0
        %1508 = vmatpush2.msra.mxu0 0.0
        %1509 = vmatprep.subr.mxu0 0.0
        %1510 = vmatpush2.msra.mxu0 0.0
        %1511 = vmatprep.subr.mxu0 0.0
        %1512 = vmatpush2.msra.mxu0 0.0
        %1513 = vmatprep.subr.mxu0 0.0
        %1514 = vmatpush2.msra.mxu0 0.0
        %1515 = vmatprep.subr.mxu0 0.0
        %1516 = vmatpush2.msra.mxu0 0.0
        %1517 = vmatprep.subr.mxu0 0.0
        %1518 = vmatpush2.msra.mxu0 0.0
        %1519 = vmatprep.subr.mxu0 0.0
        %1520 = vmatpush2.msra.mxu0 0.0
        %1521 = vmatprep.subr.mxu0 0.0
        %1522 = vmatpush2.msra.mxu0 0.0
        %1523 = vmatprep.subr.mxu0 0.0
        %1524 = vmatpush2.msra.mxu0 0.0
        %1525 = vmatprep.subr.mxu0 0.0
        %1526 = vmatpush2.msra.mxu0 0.0
        %1527 = vmatprep.mubr.f32.mxu0 0.0
        %v1528 = vand.u32 %v1043, 4294901760
        %v1529 = vsub.f32 %v1043, %v1528
        %v1530 = vand.u32 %v1529, 4294901760
        %1531 = vmatmul.mubr.f32.gmra.mxu0 %v1530
        %v1532 = vpop.f32.mrf.mxu0
        %v1533 = vadd.f32 %v1409, %v1532
        %v1534 = vpop.f32.mrf.mxu0
        %1535 = vmatprep.mubr.f32.mxu0 0.0
        %v1536 = vand.u32 %v1046, 4294901760
        %v1537 = vsub.f32 %v1046, %v1536
        %v1538 = vand.u32 %v1537, 4294901760
        %1539 = vmatmul.mubr.f32.gmra.mxu0 %v1538
        %v1540 = vpop.f32.mrf.mxu0
        %v1541 = vadd.f32 %v1416, %v1540
        %v1542 = vpop.f32.mrf.mxu0
        %1543 = vmatprep.mubr.f32.mxu0 0.0
        %v1544 = vand.u32 %v1049, 4294901760
        %v1545 = vsub.f32 %v1049, %v1544
        %v1546 = vand.u32 %v1545, 4294901760
        %1547 = vmatmul.mubr.f32.gmra.mxu0 %v1546
        %v1548 = vpop.f32.mrf.mxu0
        %v1549 = vadd.f32 %v1423, %v1548
        %v1550 = vpop.f32.mrf.mxu0
        %1551 = vmatprep.mubr.f32.mxu0 0.0
        %v1552 = vand.u32 %v1052, 4294901760
        %v1553 = vsub.f32 %v1052, %v1552
        %v1554 = vand.u32 %v1553, 4294901760
        %1555 = vmatmul.mubr.f32.gmra.mxu0 %v1554
        %v1556 = vpop.f32.mrf.mxu0
        %v1557 = vadd.f32 %v1430, %v1556
        %v1558 = vpop.f32.mrf.mxu0
        %1559 = vmatprep.mubr.f32.mxu0 0.0
        %v1560 = vand.u32 %v1055, 4294901760
        %v1561 = vsub.f32 %v1055, %v1560
        %v1562 = vand.u32 %v1561, 4294901760
        %1563 = vmatmul.mubr.f32.gmra.mxu0 %v1562
        %v1564 = vpop.f32.mrf.mxu0
        %v1565 = vadd.f32 %v1437, %v1564
        %v1566 = vpop.f32.mrf.mxu0
        %1567 = vmatprep.mubr.f32.mxu0 0.0
        %v1568 = vand.u32 %v1058, 4294901760
        %v1569 = vsub.f32 %v1058, %v1568
        %v1570 = vand.u32 %v1569, 4294901760
        %1571 = vmatmul.mubr.f32.gmra.mxu0 %v1570
        %v1572 = vpop.f32.mrf.mxu0
        %v1573 = vadd.f32 %v1444, %v1572
        %v1574 = vpop.f32.mrf.mxu0
        %1575 = vmatprep.mubr.f32.mxu0 0.0
        %v1576 = vand.u32 %v1061, 4294901760
        %v1577 = vsub.f32 %v1061, %v1576
        %v1578 = vand.u32 %v1577, 4294901760
        %1579 = vmatmul.mubr.f32.gmra.mxu0 %v1578
        %v1580 = vpop.f32.mrf.mxu0
        %v1581 = vadd.f32 %v1451, %v1580
        %v1582 = vpop.f32.mrf.mxu0
        %1583 = vmatprep.mubr.f32.mxu0 0.0
        %v1584 = vand.u32 %v1064, 4294901760
        %v1585 = vsub.f32 %v1064, %v1584
        %v1586 = vand.u32 %v1585, 4294901760
        %1587 = vmatmul.mubr.f32.gmra.mxu0 %v1586
        %v1588 = vpop.f32.mrf.mxu0
        %v1589 = vadd.f32 %v1458, %v1588
        %v1590 = vpop.f32.mrf.mxu0
        %1591 = vdwg.mxu0
        %1592 = vmatprep.subr.mxu0 0.0
        %1593 = vmatpush1.msra.mxu0 0.0
        %1594 = vmatprep.subr.mxu0 0.0
        %1595 = vmatpush1.msra.mxu0 0.0
        %1596 = vmatprep.subr.mxu0 0.0
        %1597 = vmatpush1.msra.mxu0 0.0
        %1598 = vmatprep.subr.mxu0 0.0
        %1599 = vmatpush1.msra.mxu0 0.0
        %1600 = vmatprep.subr.mxu0 0.0
        %1601 = vmatpush1.msra.mxu0 0.0
        %1602 = vmatprep.subr.mxu0 0.0
        %1603 = vmatpush1.msra.mxu0 0.0
        %1604 = vmatprep.subr.mxu0 0.0
        %1605 = vmatpush1.msra.mxu0 0.0
        %1606 = vmatprep.subr.mxu0 0.0
        %1607 = vmatpush1.msra.mxu0 0.0
        %1608 = vmatprep.subr.mxu0 0.0
        %1609 = vmatpush1.msra.mxu0 0.0
        %1610 = vmatprep.subr.mxu0 0.0
        %1611 = vmatpush1.msra.mxu0 0.0
        %1612 = vmatprep.subr.mxu0 0.0
        %1613 = vmatpush1.msra.mxu0 0.0
        %1614 = vmatprep.subr.mxu0 0.0
        %1615 = vmatpush1.msra.mxu0 0.0
        %1616 = vmatprep.subr.mxu0 0.0
        %1617 = vmatpush1.msra.mxu0 0.0
        %1618 = vmatprep.subr.mxu0 0.0
        %1619 = vmatpush1.msra.mxu0 0.0
        %1620 = vmatprep.subr.mxu0 0.0
        %v1621 = vand.u32 %v176, 4294901760
        %v1622 = vsub.f32 %v176, %v1621
        %v1623 = vand.u32 %v1622, 4294901760
        %1624 = vmatpush1.msra.mxu0 %v1623
        %1625 = vmatprep.subr.mxu0 0.0
        %v1626 = vand.u32 %v175, 4294901760
        %v1627 = vsub.f32 %v175, %v1626
        %v1628 = vand.u32 %v1627, 4294901760
        %1629 = vmatpush1.msra.mxu0 %v1628
        %1630 = vmatprep.subr.mxu0 0.0
        %1631 = vmatpush2.msra.mxu0 0.0
        %1632 = vmatprep.subr.mxu0 0.0
        %1633 = vmatpush2.msra.mxu0 0.0
        %1634 = vmatprep.subr.mxu0 0.0
        %1635 = vmatpush2.msra.mxu0 0.0
        %1636 = vmatprep.subr.mxu0 0.0
        %1637 = vmatpush2.msra.mxu0 0.0
        %1638 = vmatprep.subr.mxu0 0.0
        %1639 = vmatpush2.msra.mxu0 0.0
        %1640 = vmatprep.subr.mxu0 0.0
        %1641 = vmatpush2.msra.mxu0 0.0
        %1642 = vmatprep.subr.mxu0 0.0
        %1643 = vmatpush2.msra.mxu0 0.0
        %1644 = vmatprep.subr.mxu0 0.0
        %1645 = vmatpush2.msra.mxu0 0.0
        %1646 = vmatprep.subr.mxu0 0.0
        %1647 = vmatpush2.msra.mxu0 0.0
        %1648 = vmatprep.subr.mxu0 0.0
        %1649 = vmatpush2.msra.mxu0 0.0
        %1650 = vmatprep.subr.mxu0 0.0
        %1651 = vmatpush2.msra.mxu0 0.0
        %1652 = vmatprep.subr.mxu0 0.0
        %1653 = vmatpush2.msra.mxu0 0.0
        %1654 = vmatprep.subr.mxu0 0.0
        %1655 = vmatpush2.msra.mxu0 0.0
        %1656 = vmatprep.subr.mxu0 0.0
        %1657 = vmatpush2.msra.mxu0 0.0
        %1658 = vmatprep.subr.mxu0 0.0
        %1659 = vmatpush2.msra.mxu0 0.0
        %1660 = vmatprep.subr.mxu0 0.0
        %1661 = vmatpush2.msra.mxu0 0.0
        %1662 = vmatprep.mubr.f32.mxu0 0.0
        %v1663 = vand.u32 %v1043, 4294901760
        %1664 = vmatmul.mubr.f32.gmra.mxu0 %v1663
        %v1665 = vpop.f32.mrf.mxu0
        %v1666 = vadd.f32 %v1533, %v1665
        %v1667 = vpop.f32.mrf.mxu0
        %1668 = vmatprep.mubr.f32.mxu0 0.0
        %v1669 = vand.u32 %v1046, 4294901760
        %1670 = vmatmul.mubr.f32.gmra.mxu0 %v1669
        %v1671 = vpop.f32.mrf.mxu0
        %v1672 = vadd.f32 %v1541, %v1671
        %v1673 = vpop.f32.mrf.mxu0
        %1674 = vmatprep.mubr.f32.mxu0 0.0
        %v1675 = vand.u32 %v1049, 4294901760
        %1676 = vmatmul.mubr.f32.gmra.mxu0 %v1675
        %v1677 = vpop.f32.mrf.mxu0
        %v1678 = vadd.f32 %v1549, %v1677
        %v1679 = vpop.f32.mrf.mxu0
        %1680 = vmatprep.mubr.f32.mxu0 0.0
        %v1681 = vand.u32 %v1052, 4294901760
        %1682 = vmatmul.mubr.f32.gmra.mxu0 %v1681
        %v1683 = vpop.f32.mrf.mxu0
        %v1684 = vadd.f32 %v1557, %v1683
        %v1685 = vpop.f32.mrf.mxu0
        %1686 = vmatprep.mubr.f32.mxu0 0.0
        %v1687 = vand.u32 %v1055, 4294901760
        %1688 = vmatmul.mubr.f32.gmra.mxu0 %v1687
        %v1689 = vpop.f32.mrf.mxu0
        %v1690 = vadd.f32 %v1565, %v1689
        %v1691 = vpop.f32.mrf.mxu0
        %1692 = vmatprep.mubr.f32.mxu0 0.0
        %v1693 = vand.u32 %v1058, 4294901760
        %1694 = vmatmul.mubr.f32.gmra.mxu0 %v1693
        %v1695 = vpop.f32.mrf.mxu0
        %v1696 = vadd.f32 %v1573, %v1695
        %v1697 = vpop.f32.mrf.mxu0
        %1698 = vmatprep.mubr.f32.mxu0 0.0
        %v1699 = vand.u32 %v1061, 4294901760
        %1700 = vmatmul.mubr.f32.gmra.mxu0 %v1699
        %v1701 = vpop.f32.mrf.mxu0
        %v1702 = vadd.f32 %v1581, %v1701
        %v1703 = vpop.f32.mrf.mxu0
        %1704 = vmatprep.mubr.f32.mxu0 0.0
        %v1705 = vand.u32 %v1064, 4294901760
        %1706 = vmatmul.mubr.f32.gmra.mxu0 %v1705
        %v1707 = vpop.f32.mrf.mxu0
        %v1708 = vadd.f32 %v1589, %v1707
        %v1709 = vpop.f32.mrf.mxu0
        %1710 = vdwg.mxu0
        %1711 = vmatprep.subr.mxu0 0.0
        %1712 = vmatpush1.msra.mxu0 0.0
        %1713 = vmatprep.subr.mxu0 0.0
        %1714 = vmatpush1.msra.mxu0 0.0
        %1715 = vmatprep.subr.mxu0 0.0
        %1716 = vmatpush1.msra.mxu0 0.0
        %1717 = vmatprep.subr.mxu0 0.0
        %1718 = vmatpush1.msra.mxu0 0.0
        %1719 = vmatprep.subr.mxu0 0.0
        %1720 = vmatpush1.msra.mxu0 0.0
        %1721 = vmatprep.subr.mxu0 0.0
        %1722 = vmatpush1.msra.mxu0 0.0
        %1723 = vmatprep.subr.mxu0 0.0
        %1724 = vmatpush1.msra.mxu0 0.0
        %1725 = vmatprep.subr.mxu0 0.0
        %1726 = vmatpush1.msra.mxu0 0.0
        %1727 = vmatprep.subr.mxu0 0.0
        %1728 = vmatpush1.msra.mxu0 0.0
        %1729 = vmatprep.subr.mxu0 0.0
        %1730 = vmatpush1.msra.mxu0 0.0
        %1731 = vmatprep.subr.mxu0 0.0
        %1732 = vmatpush1.msra.mxu0 0.0
        %1733 = vmatprep.subr.mxu0 0.0
        %1734 = vmatpush1.msra.mxu0 0.0
        %1735 = vmatprep.subr.mxu0 0.0
        %1736 = vmatpush1.msra.mxu0 0.0
        %1737 = vmatprep.subr.mxu0 0.0
        %1738 = vmatpush1.msra.mxu0 0.0
        %1739 = vmatprep.subr.mxu0 0.0
        %v1740 = vand.u32 %v176, 4294901760
        %1741 = vmatpush1.msra.mxu0 %v1740
        %1742 = vmatprep.subr.mxu0 0.0
        %v1743 = vand.u32 %v175, 4294901760
        %1744 = vmatpush1.msra.mxu0 %v1743
        %1745 = vmatprep.subr.mxu0 0.0
        %1746 = vmatpush2.msra.mxu0 0.0
        %1747 = vmatprep.subr.mxu0 0.0
        %1748 = vmatpush2.msra.mxu0 0.0
        %1749 = vmatprep.subr.mxu0 0.0
        %1750 = vmatpush2.msra.mxu0 0.0
        %1751 = vmatprep.subr.mxu0 0.0
        %1752 = vmatpush2.msra.mxu0 0.0
        %1753 = vmatprep.subr.mxu0 0.0
        %1754 = vmatpush2.msra.mxu0 0.0
        %1755 = vmatprep.subr.mxu0 0.0
        %1756 = vmatpush2.msra.mxu0 0.0
        %1757 = vmatprep.subr.mxu0 0.0
        %1758 = vmatpush2.msra.mxu0 0.0
        %1759 = vmatprep.subr.mxu0 0.0
        %1760 = vmatpush2.msra.mxu0 0.0
        %1761 = vmatprep.subr.mxu0 0.0
        %1762 = vmatpush2.msra.mxu0 0.0
        %1763 = vmatprep.subr.mxu0 0.0
        %1764 = vmatpush2.msra.mxu0 0.0
        %1765 = vmatprep.subr.mxu0 0.0
        %1766 = vmatpush2.msra.mxu0 0.0
        %1767 = vmatprep.subr.mxu0 0.0
        %1768 = vmatpush2.msra.mxu0 0.0
        %1769 = vmatprep.subr.mxu0 0.0
        %1770 = vmatpush2.msra.mxu0 0.0
        %1771 = vmatprep.subr.mxu0 0.0
        %1772 = vmatpush2.msra.mxu0 0.0
        %1773 = vmatprep.subr.mxu0 0.0
        %1774 = vmatpush2.msra.mxu0 0.0
        %1775 = vmatprep.subr.mxu0 0.0
        %1776 = vmatpush2.msra.mxu0 0.0
        %1777 = vmatprep.mubr.f32.mxu0 0.0
        %v1778 = vand.u32 %v1043, 4294901760
        %1779 = vmatmul.mubr.f32.gmra.mxu0 %v1778
        %v1780 = vpop.f32.mrf.mxu0
        %v1781 = vadd.f32 %v1666, %v1780
        %v1782 = vpop.f32.mrf.mxu0
        %1783 = vmatprep.mubr.f32.mxu0 0.0
        %v1784 = vand.u32 %v1046, 4294901760
        %1785 = vmatmul.mubr.f32.gmra.mxu0 %v1784
        %v1786 = vpop.f32.mrf.mxu0
        %v1787 = vadd.f32 %v1672, %v1786
        %v1788 = vpop.f32.mrf.mxu0
        %1789 = vmatprep.mubr.f32.mxu0 0.0
        %v1790 = vand.u32 %v1049, 4294901760
        %1791 = vmatmul.mubr.f32.gmra.mxu0 %v1790
        %v1792 = vpop.f32.mrf.mxu0
        %v1793 = vadd.f32 %v1678, %v1792
        %v1794 = vpop.f32.mrf.mxu0
        %1795 = vmatprep.mubr.f32.mxu0 0.0
        %v1796 = vand.u32 %v1052, 4294901760
        %1797 = vmatmul.mubr.f32.gmra.mxu0 %v1796
        %v1798 = vpop.f32.mrf.mxu0
        %v1799 = vadd.f32 %v1684, %v1798
        %v1800 = vpop.f32.mrf.mxu0
        %1801 = vmatprep.mubr.f32.mxu0 0.0
        %v1802 = vand.u32 %v1055, 4294901760
        %1803 = vmatmul.mubr.f32.gmra.mxu0 %v1802
        %v1804 = vpop.f32.mrf.mxu0
        %v1805 = vadd.f32 %v1690, %v1804
        %v1806 = vpop.f32.mrf.mxu0
        %1807 = vmatprep.mubr.f32.mxu0 0.0
        %v1808 = vand.u32 %v1058, 4294901760
        %1809 = vmatmul.mubr.f32.gmra.mxu0 %v1808
        %v1810 = vpop.f32.mrf.mxu0
        %v1811 = vadd.f32 %v1696, %v1810
        %v1812 = vpop.f32.mrf.mxu0
        %1813 = vmatprep.mubr.f32.mxu0 0.0
        %v1814 = vand.u32 %v1061, 4294901760
        %1815 = vmatmul.mubr.f32.gmra.mxu0 %v1814
        %v1816 = vpop.f32.mrf.mxu0
        %v1817 = vadd.f32 %v1702, %v1816
        %v1818 = vpop.f32.mrf.mxu0
        %1819 = vmatprep.mubr.f32.mxu0 0.0
        %v1820 = vand.u32 %v1064, 4294901760
        %1821 = vmatmul.mubr.f32.gmra.mxu0 %v1820
        %v1822 = vpop.f32.mrf.mxu0
        %v1823 = vadd.f32 %v1708, %v1822
        %v1824 = vpop.f32.mrf.mxu0
        %1825 = vdwg.mxu0
        %1826 = vmatprep.subr.mxu0 0.0
        %1827 = vmatpush1.msra.mxu0 0.0
        %1828 = vmatprep.subr.mxu0 0.0
        %1829 = vmatpush1.msra.mxu0 0.0
        %1830 = vmatprep.subr.mxu0 0.0
        %1831 = vmatpush1.msra.mxu0 0.0
        %1832 = vmatprep.subr.mxu0 0.0
        %1833 = vmatpush1.msra.mxu0 0.0
        %1834 = vmatprep.subr.mxu0 0.0
        %1835 = vmatpush1.msra.mxu0 0.0
        %1836 = vmatprep.subr.mxu0 0.0
        %1837 = vmatpush1.msra.mxu0 0.0
        %1838 = vmatprep.subr.mxu0 0.0
        %1839 = vmatpush1.msra.mxu0 0.0
        %1840 = vmatprep.subr.mxu0 0.0
        %1841 = vmatpush1.msra.mxu0 0.0
        %1842 = vmatprep.subr.mxu0 0.0
        %1843 = vmatpush1.msra.mxu0 0.0
        %1844 = vmatprep.subr.mxu0 0.0
        %1845 = vmatpush1.msra.mxu0 0.0
        %1846 = vmatprep.subr.mxu0 0.0
        %1847 = vmatpush1.msra.mxu0 0.0
        %1848 = vmatprep.subr.mxu0 0.0
        %1849 = vmatpush1.msra.mxu0 0.0
        %1850 = vmatprep.subr.mxu0 0.0
        %1851 = vmatpush1.msra.mxu0 0.0
        %1852 = vmatprep.subr.mxu0 0.0
        %1853 = vmatpush1.msra.mxu0 0.0
        %1854 = vmatprep.subr.mxu0 0.0
        %v1855 = vand.u32 %v186, 4294901760
        %1856 = vmatpush1.msra.mxu0 %v1855
        %1857 = vmatprep.subr.mxu0 0.0
        %v1858 = vand.u32 %v185, 4294901760
        %1859 = vmatpush1.msra.mxu0 %v1858
        %1860 = vmatprep.subr.mxu0 0.0
        %1861 = vmatpush2.msra.mxu0 0.0
        %1862 = vmatprep.subr.mxu0 0.0
        %1863 = vmatpush2.msra.mxu0 0.0
        %1864 = vmatprep.subr.mxu0 0.0
        %1865 = vmatpush2.msra.mxu0 0.0
        %1866 = vmatprep.subr.mxu0 0.0
        %1867 = vmatpush2.msra.mxu0 0.0
        %1868 = vmatprep.subr.mxu0 0.0
        %1869 = vmatpush2.msra.mxu0 0.0
        %1870 = vmatprep.subr.mxu0 0.0
        %1871 = vmatpush2.msra.mxu0 0.0
        %1872 = vmatprep.subr.mxu0 0.0
        %1873 = vmatpush2.msra.mxu0 0.0
        %1874 = vmatprep.subr.mxu0 0.0
        %1875 = vmatpush2.msra.mxu0 0.0
        %1876 = vmatprep.subr.mxu0 0.0
        %1877 = vmatpush2.msra.mxu0 0.0
        %1878 = vmatprep.subr.mxu0 0.0
        %1879 = vmatpush2.msra.mxu0 0.0
        %1880 = vmatprep.subr.mxu0 0.0
        %1881 = vmatpush2.msra.mxu0 0.0
        %1882 = vmatprep.subr.mxu0 0.0
        %1883 = vmatpush2.msra.mxu0 0.0
        %1884 = vmatprep.subr.mxu0 0.0
        %1885 = vmatpush2.msra.mxu0 0.0
        %1886 = vmatprep.subr.mxu0 0.0
        %1887 = vmatpush2.msra.mxu0 0.0
        %1888 = vmatprep.subr.mxu0 0.0
        %1889 = vmatpush2.msra.mxu0 0.0
        %1890 = vmatprep.subr.mxu0 0.0
        %1891 = vmatpush2.msra.mxu0 0.0
        %1892 = vmatprep.mubr.f32.mxu0 0.0
        %v1893 = vand.u32 %v1043, 4294901760
        %v1894 = vsub.f32 %v1043, %v1893
        %v1895 = vand.u32 %v1894, 4294901760
        %v1896 = vsub.f32 %v1894, %v1895
        %v1897 = vand.u32 %v1896, 4294901760
        %1898 = vmatmul.mubr.f32.gmra.mxu0 %v1897
        %v1899 = vpop.f32.mrf.mxu0
        %v1900 = vadd.f32 0.0, %v1899
        %v1901 = vpop.f32.mrf.mxu0
        %1902 = vmatprep.mubr.f32.mxu0 0.0
        %v1903 = vand.u32 %v1046, 4294901760
        %v1904 = vsub.f32 %v1046, %v1903
        %v1905 = vand.u32 %v1904, 4294901760
        %v1906 = vsub.f32 %v1904, %v1905
        %v1907 = vand.u32 %v1906, 4294901760
        %1908 = vmatmul.mubr.f32.gmra.mxu0 %v1907
        %v1909 = vpop.f32.mrf.mxu0
        %v1910 = vadd.f32 0.0, %v1909
        %v1911 = vpop.f32.mrf.mxu0
        %1912 = vmatprep.mubr.f32.mxu0 0.0
        %v1913 = vand.u32 %v1049, 4294901760
        %v1914 = vsub.f32 %v1049, %v1913
        %v1915 = vand.u32 %v1914, 4294901760
        %v1916 = vsub.f32 %v1914, %v1915
        %v1917 = vand.u32 %v1916, 4294901760
        %1918 = vmatmul.mubr.f32.gmra.mxu0 %v1917
        %v1919 = vpop.f32.mrf.mxu0
        %v1920 = vadd.f32 0.0, %v1919
        %v1921 = vpop.f32.mrf.mxu0
        %1922 = vmatprep.mubr.f32.mxu0 0.0
        %v1923 = vand.u32 %v1052, 4294901760
        %v1924 = vsub.f32 %v1052, %v1923
        %v1925 = vand.u32 %v1924, 4294901760
        %v1926 = vsub.f32 %v1924, %v1925
        %v1927 = vand.u32 %v1926, 4294901760
        %1928 = vmatmul.mubr.f32.gmra.mxu0 %v1927
        %v1929 = vpop.f32.mrf.mxu0
        %v1930 = vadd.f32 0.0, %v1929
        %v1931 = vpop.f32.mrf.mxu0
        %1932 = vmatprep.mubr.f32.mxu0 0.0
        %v1933 = vand.u32 %v1055, 4294901760
        %v1934 = vsub.f32 %v1055, %v1933
        %v1935 = vand.u32 %v1934, 4294901760
        %v1936 = vsub.f32 %v1934, %v1935
        %v1937 = vand.u32 %v1936, 4294901760
        %1938 = vmatmul.mubr.f32.gmra.mxu0 %v1937
        %v1939 = vpop.f32.mrf.mxu0
        %v1940 = vadd.f32 0.0, %v1939
        %v1941 = vpop.f32.mrf.mxu0
        %1942 = vmatprep.mubr.f32.mxu0 0.0
        %v1943 = vand.u32 %v1058, 4294901760
        %v1944 = vsub.f32 %v1058, %v1943
        %v1945 = vand.u32 %v1944, 4294901760
        %v1946 = vsub.f32 %v1944, %v1945
        %v1947 = vand.u32 %v1946, 4294901760
        %1948 = vmatmul.mubr.f32.gmra.mxu0 %v1947
        %v1949 = vpop.f32.mrf.mxu0
        %v1950 = vadd.f32 0.0, %v1949
        %v1951 = vpop.f32.mrf.mxu0
        %1952 = vmatprep.mubr.f32.mxu0 0.0
        %v1953 = vand.u32 %v1061, 4294901760
        %v1954 = vsub.f32 %v1061, %v1953
        %v1955 = vand.u32 %v1954, 4294901760
        %v1956 = vsub.f32 %v1954, %v1955
        %v1957 = vand.u32 %v1956, 4294901760
        %1958 = vmatmul.mubr.f32.gmra.mxu0 %v1957
        %v1959 = vpop.f32.mrf.mxu0
        %v1960 = vadd.f32 0.0, %v1959
        %v1961 = vpop.f32.mrf.mxu0
        %1962 = vmatprep.mubr.f32.mxu0 0.0
        %v1963 = vand.u32 %v1064, 4294901760
        %v1964 = vsub.f32 %v1064, %v1963
        %v1965 = vand.u32 %v1964, 4294901760
        %v1966 = vsub.f32 %v1964, %v1965
        %v1967 = vand.u32 %v1966, 4294901760
        %1968 = vmatmul.mubr.f32.gmra.mxu0 %v1967
        %v1969 = vpop.f32.mrf.mxu0
        %v1970 = vadd.f32 0.0, %v1969
        %v1971 = vpop.f32.mrf.mxu0
        %1972 = vdwg.mxu0
        %1973 = vmatprep.subr.mxu0 0.0
        %1974 = vmatpush1.msra.mxu0 0.0
        %1975 = vmatprep.subr.mxu0 0.0
        %1976 = vmatpush1.msra.mxu0 0.0
        %1977 = vmatprep.subr.mxu0 0.0
        %1978 = vmatpush1.msra.mxu0 0.0
        %1979 = vmatprep.subr.mxu0 0.0
        %1980 = vmatpush1.msra.mxu0 0.0
        %1981 = vmatprep.subr.mxu0 0.0
        %1982 = vmatpush1.msra.mxu0 0.0
        %1983 = vmatprep.subr.mxu0 0.0
        %1984 = vmatpush1.msra.mxu0 0.0
        %1985 = vmatprep.subr.mxu0 0.0
        %1986 = vmatpush1.msra.mxu0 0.0
        %1987 = vmatprep.subr.mxu0 0.0
        %1988 = vmatpush1.msra.mxu0 0.0
        %1989 = vmatprep.subr.mxu0 0.0
        %1990 = vmatpush1.msra.mxu0 0.0
        %1991 = vmatprep.subr.mxu0 0.0
        %1992 = vmatpush1.msra.mxu0 0.0
        %1993 = vmatprep.subr.mxu0 0.0
        %1994 = vmatpush1.msra.mxu0 0.0
        %1995 = vmatprep.subr.mxu0 0.0
        %1996 = vmatpush1.msra.mxu0 0.0
        %1997 = vmatprep.subr.mxu0 0.0
        %1998 = vmatpush1.msra.mxu0 0.0
        %1999 = vmatprep.subr.mxu0 0.0
        %2000 = vmatpush1.msra.mxu0 0.0
        %2001 = vmatprep.subr.mxu0 0.0
        %v2002 = vand.u32 %v186, 4294901760
        %v2003 = vsub.f32 %v186, %v2002
        %v2004 = vand.u32 %v2003, 4294901760
        %v2005 = vsub.f32 %v2003, %v2004
        %v2006 = vand.u32 %v2005, 4294901760
        %2007 = vmatpush1.msra.mxu0 %v2006
        %2008 = vmatprep.subr.mxu0 0.0
        %v2009 = vand.u32 %v185, 4294901760
        %v2010 = vsub.f32 %v185, %v2009
        %v2011 = vand.u32 %v2010, 4294901760
        %v2012 = vsub.f32 %v2010, %v2011
        %v2013 = vand.u32 %v2012, 4294901760
        %2014 = vmatpush1.msra.mxu0 %v2013
        %2015 = vmatprep.subr.mxu0 0.0
        %2016 = vmatpush2.msra.mxu0 0.0
        %2017 = vmatprep.subr.mxu0 0.0
        %2018 = vmatpush2.msra.mxu0 0.0
        %2019 = vmatprep.subr.mxu0 0.0
        %2020 = vmatpush2.msra.mxu0 0.0
        %2021 = vmatprep.subr.mxu0 0.0
        %2022 = vmatpush2.msra.mxu0 0.0
        %2023 = vmatprep.subr.mxu0 0.0
        %2024 = vmatpush2.msra.mxu0 0.0
        %2025 = vmatprep.subr.mxu0 0.0
        %2026 = vmatpush2.msra.mxu0 0.0
        %2027 = vmatprep.subr.mxu0 0.0
        %2028 = vmatpush2.msra.mxu0 0.0
        %2029 = vmatprep.subr.mxu0 0.0
        %2030 = vmatpush2.msra.mxu0 0.0
        %2031 = vmatprep.subr.mxu0 0.0
        %2032 = vmatpush2.msra.mxu0 0.0
        %2033 = vmatprep.subr.mxu0 0.0
        %2034 = vmatpush2.msra.mxu0 0.0
        %2035 = vmatprep.subr.mxu0 0.0
        %2036 = vmatpush2.msra.mxu0 0.0
        %2037 = vmatprep.subr.mxu0 0.0
        %2038 = vmatpush2.msra.mxu0 0.0
        %2039 = vmatprep.subr.mxu0 0.0
        %2040 = vmatpush2.msra.mxu0 0.0
        %2041 = vmatprep.subr.mxu0 0.0
        %2042 = vmatpush2.msra.mxu0 0.0
        %2043 = vmatprep.subr.mxu0 0.0
        %2044 = vmatpush2.msra.mxu0 0.0
        %2045 = vmatprep.subr.mxu0 0.0
        %2046 = vmatpush2.msra.mxu0 0.0
        %2047 = vmatprep.mubr.f32.mxu0 0.0
        %v2048 = vand.u32 %v1043, 4294901760
        %2049 = vmatmul.mubr.f32.gmra.mxu0 %v2048
        %v2050 = vpop.f32.mrf.mxu0
        %v2051 = vadd.f32 %v1900, %v2050
        %v2052 = vpop.f32.mrf.mxu0
        %2053 = vmatprep.mubr.f32.mxu0 0.0
        %v2054 = vand.u32 %v1046, 4294901760
        %2055 = vmatmul.mubr.f32.gmra.mxu0 %v2054
        %v2056 = vpop.f32.mrf.mxu0
        %v2057 = vadd.f32 %v1910, %v2056
        %v2058 = vpop.f32.mrf.mxu0
        %2059 = vmatprep.mubr.f32.mxu0 0.0
        %v2060 = vand.u32 %v1049, 4294901760
        %2061 = vmatmul.mubr.f32.gmra.mxu0 %v2060
        %v2062 = vpop.f32.mrf.mxu0
        %v2063 = vadd.f32 %v1920, %v2062
        %v2064 = vpop.f32.mrf.mxu0
        %2065 = vmatprep.mubr.f32.mxu0 0.0
        %v2066 = vand.u32 %v1052, 4294901760
        %2067 = vmatmul.mubr.f32.gmra.mxu0 %v2066
        %v2068 = vpop.f32.mrf.mxu0
        %v2069 = vadd.f32 %v1930, %v2068
        %v2070 = vpop.f32.mrf.mxu0
        %2071 = vmatprep.mubr.f32.mxu0 0.0
        %v2072 = vand.u32 %v1055, 4294901760
        %2073 = vmatmul.mubr.f32.gmra.mxu0 %v2072
        %v2074 = vpop.f32.mrf.mxu0
        %v2075 = vadd.f32 %v1940, %v2074
        %v2076 = vpop.f32.mrf.mxu0
        %2077 = vmatprep.mubr.f32.mxu0 0.0
        %v2078 = vand.u32 %v1058, 4294901760
        %2079 = vmatmul.mubr.f32.gmra.mxu0 %v2078
        %v2080 = vpop.f32.mrf.mxu0
        %v2081 = vadd.f32 %v1950, %v2080
        %v2082 = vpop.f32.mrf.mxu0
        %2083 = vmatprep.mubr.f32.mxu0 0.0
        %v2084 = vand.u32 %v1061, 4294901760
        %2085 = vmatmul.mubr.f32.gmra.mxu0 %v2084
        %v2086 = vpop.f32.mrf.mxu0
        %v2087 = vadd.f32 %v1960, %v2086
        %v2088 = vpop.f32.mrf.mxu0
        %2089 = vmatprep.mubr.f32.mxu0 0.0
        %v2090 = vand.u32 %v1064, 4294901760
        %2091 = vmatmul.mubr.f32.gmra.mxu0 %v2090
        %v2092 = vpop.f32.mrf.mxu0
        %v2093 = vadd.f32 %v1970, %v2092
        %v2094 = vpop.f32.mrf.mxu0
        %2095 = vdwg.mxu0
        %2096 = vmatprep.subr.mxu0 0.0
        %2097 = vmatpush1.msra.mxu0 0.0
        %2098 = vmatprep.subr.mxu0 0.0
        %2099 = vmatpush1.msra.mxu0 0.0
        %2100 = vmatprep.subr.mxu0 0.0
        %2101 = vmatpush1.msra.mxu0 0.0
        %2102 = vmatprep.subr.mxu0 0.0
        %2103 = vmatpush1.msra.mxu0 0.0
        %2104 = vmatprep.subr.mxu0 0.0
        %2105 = vmatpush1.msra.mxu0 0.0
        %2106 = vmatprep.subr.mxu0 0.0
        %2107 = vmatpush1.msra.mxu0 0.0
        %2108 = vmatprep.subr.mxu0 0.0
        %2109 = vmatpush1.msra.mxu0 0.0
        %2110 = vmatprep.subr.mxu0 0.0
        %2111 = vmatpush1.msra.mxu0 0.0
        %2112 = vmatprep.subr.mxu0 0.0
        %2113 = vmatpush1.msra.mxu0 0.0
        %2114 = vmatprep.subr.mxu0 0.0
        %2115 = vmatpush1.msra.mxu0 0.0
        %2116 = vmatprep.subr.mxu0 0.0
        %2117 = vmatpush1.msra.mxu0 0.0
        %2118 = vmatprep.subr.mxu0 0.0
        %2119 = vmatpush1.msra.mxu0 0.0
        %2120 = vmatprep.subr.mxu0 0.0
        %2121 = vmatpush1.msra.mxu0 0.0
        %2122 = vmatprep.subr.mxu0 0.0
        %2123 = vmatpush1.msra.mxu0 0.0
        %2124 = vmatprep.subr.mxu0 0.0
        %v2125 = vand.u32 %v186, 4294901760
        %v2126 = vsub.f32 %v186, %v2125
        %2127 = vmatpush1.msra.mxu0 %v2126
        %2128 = vmatprep.subr.mxu0 0.0
        %v2129 = vand.u32 %v185, 4294901760
        %v2130 = vsub.f32 %v185, %v2129
        %2131 = vmatpush1.msra.mxu0 %v2130
        %2132 = vmatprep.subr.mxu0 0.0
        %2133 = vmatpush2.msra.mxu0 0.0
        %2134 = vmatprep.subr.mxu0 0.0
        %2135 = vmatpush2.msra.mxu0 0.0
        %2136 = vmatprep.subr.mxu0 0.0
        %2137 = vmatpush2.msra.mxu0 0.0
        %2138 = vmatprep.subr.mxu0 0.0
        %2139 = vmatpush2.msra.mxu0 0.0
        %2140 = vmatprep.subr.mxu0 0.0
        %2141 = vmatpush2.msra.mxu0 0.0
        %2142 = vmatprep.subr.mxu0 0.0
        %2143 = vmatpush2.msra.mxu0 0.0
        %2144 = vmatprep.subr.mxu0 0.0
        %2145 = vmatpush2.msra.mxu0 0.0
        %2146 = vmatprep.subr.mxu0 0.0
        %2147 = vmatpush2.msra.mxu0 0.0
        %2148 = vmatprep.subr.mxu0 0.0
        %2149 = vmatpush2.msra.mxu0 0.0
        %2150 = vmatprep.subr.mxu0 0.0
        %2151 = vmatpush2.msra.mxu0 0.0
        %2152 = vmatprep.subr.mxu0 0.0
        %2153 = vmatpush2.msra.mxu0 0.0
        %2154 = vmatprep.subr.mxu0 0.0
        %2155 = vmatpush2.msra.mxu0 0.0
        %2156 = vmatprep.subr.mxu0 0.0
        %2157 = vmatpush2.msra.mxu0 0.0
        %2158 = vmatprep.subr.mxu0 0.0
        %2159 = vmatpush2.msra.mxu0 0.0
        %2160 = vmatprep.subr.mxu0 0.0
        %2161 = vmatpush2.msra.mxu0 0.0
        %2162 = vmatprep.subr.mxu0 0.0
        %2163 = vmatpush2.msra.mxu0 0.0
        %2164 = vmatprep.mubr.f32.mxu0 0.0
        %v2165 = vand.u32 %v1043, 4294901760
        %v2166 = vsub.f32 %v1043, %v2165
        %2167 = vmatmul.mubr.f32.gmra.mxu0 %v2166
        %v2168 = vpop.f32.mrf.mxu0
        %v2169 = vadd.f32 %v2051, %v2168
        %v2170 = vpop.f32.mrf.mxu0
        %2171 = vmatprep.mubr.f32.mxu0 0.0
        %v2172 = vand.u32 %v1046, 4294901760
        %v2173 = vsub.f32 %v1046, %v2172
        %2174 = vmatmul.mubr.f32.gmra.mxu0 %v2173
        %v2175 = vpop.f32.mrf.mxu0
        %v2176 = vadd.f32 %v2057, %v2175
        %v2177 = vpop.f32.mrf.mxu0
        %2178 = vmatprep.mubr.f32.mxu0 0.0
        %v2179 = vand.u32 %v1049, 4294901760
        %v2180 = vsub.f32 %v1049, %v2179
        %2181 = vmatmul.mubr.f32.gmra.mxu0 %v2180
        %v2182 = vpop.f32.mrf.mxu0
        %v2183 = vadd.f32 %v2063, %v2182
        %v2184 = vpop.f32.mrf.mxu0
        %2185 = vmatprep.mubr.f32.mxu0 0.0
        %v2186 = vand.u32 %v1052, 4294901760
        %v2187 = vsub.f32 %v1052, %v2186
        %2188 = vmatmul.mubr.f32.gmra.mxu0 %v2187
        %v2189 = vpop.f32.mrf.mxu0
        %v2190 = vadd.f32 %v2069, %v2189
        %v2191 = vpop.f32.mrf.mxu0
        %2192 = vmatprep.mubr.f32.mxu0 0.0
        %v2193 = vand.u32 %v1055, 4294901760
        %v2194 = vsub.f32 %v1055, %v2193
        %2195 = vmatmul.mubr.f32.gmra.mxu0 %v2194
        %v2196 = vpop.f32.mrf.mxu0
        %v2197 = vadd.f32 %v2075, %v2196
        %v2198 = vpop.f32.mrf.mxu0
        %2199 = vmatprep.mubr.f32.mxu0 0.0
        %v2200 = vand.u32 %v1058, 4294901760
        %v2201 = vsub.f32 %v1058, %v2200
        %2202 = vmatmul.mubr.f32.gmra.mxu0 %v2201
        %v2203 = vpop.f32.mrf.mxu0
        %v2204 = vadd.f32 %v2081, %v2203
        %v2205 = vpop.f32.mrf.mxu0
        %2206 = vmatprep.mubr.f32.mxu0 0.0
        %v2207 = vand.u32 %v1061, 4294901760
        %v2208 = vsub.f32 %v1061, %v2207
        %2209 = vmatmul.mubr.f32.gmra.mxu0 %v2208
        %v2210 = vpop.f32.mrf.mxu0
        %v2211 = vadd.f32 %v2087, %v2210
        %v2212 = vpop.f32.mrf.mxu0
        %2213 = vmatprep.mubr.f32.mxu0 0.0
        %v2214 = vand.u32 %v1064, 4294901760
        %v2215 = vsub.f32 %v1064, %v2214
        %2216 = vmatmul.mubr.f32.gmra.mxu0 %v2215
        %v2217 = vpop.f32.mrf.mxu0
        %v2218 = vadd.f32 %v2093, %v2217
        %v2219 = vpop.f32.mrf.mxu0
        %2220 = vdwg.mxu0
        %2221 = vmatprep.subr.mxu0 0.0
        %2222 = vmatpush1.msra.mxu0 0.0
        %2223 = vmatprep.subr.mxu0 0.0
        %2224 = vmatpush1.msra.mxu0 0.0
        %2225 = vmatprep.subr.mxu0 0.0
        %2226 = vmatpush1.msra.mxu0 0.0
        %2227 = vmatprep.subr.mxu0 0.0
        %2228 = vmatpush1.msra.mxu0 0.0
        %2229 = vmatprep.subr.mxu0 0.0
        %2230 = vmatpush1.msra.mxu0 0.0
        %2231 = vmatprep.subr.mxu0 0.0
        %2232 = vmatpush1.msra.mxu0 0.0
        %2233 = vmatprep.subr.mxu0 0.0
        %2234 = vmatpush1.msra.mxu0 0.0
        %2235 = vmatprep.subr.mxu0 0.0
        %2236 = vmatpush1.msra.mxu0 0.0
        %2237 = vmatprep.subr.mxu0 0.0
        %2238 = vmatpush1.msra.mxu0 0.0
        %2239 = vmatprep.subr.mxu0 0.0
        %2240 = vmatpush1.msra.mxu0 0.0
        %2241 = vmatprep.subr.mxu0 0.0
        %2242 = vmatpush1.msra.mxu0 0.0
        %2243 = vmatprep.subr.mxu0 0.0
        %2244 = vmatpush1.msra.mxu0 0.0
        %2245 = vmatprep.subr.mxu0 0.0
        %2246 = vmatpush1.msra.mxu0 0.0
        %2247 = vmatprep.subr.mxu0 0.0
        %2248 = vmatpush1.msra.mxu0 0.0
        %2249 = vmatprep.subr.mxu0 0.0
        %v2250 = vand.u32 %v186, 4294901760
        %2251 = vmatpush1.msra.mxu0 %v2250
        %2252 = vmatprep.subr.mxu0 0.0
        %v2253 = vand.u32 %v185, 4294901760
        %2254 = vmatpush1.msra.mxu0 %v2253
        %2255 = vmatprep.subr.mxu0 0.0
        %2256 = vmatpush2.msra.mxu0 0.0
        %2257 = vmatprep.subr.mxu0 0.0
        %2258 = vmatpush2.msra.mxu0 0.0
        %2259 = vmatprep.subr.mxu0 0.0
        %2260 = vmatpush2.msra.mxu0 0.0
        %2261 = vmatprep.subr.mxu0 0.0
        %2262 = vmatpush2.msra.mxu0 0.0
        %2263 = vmatprep.subr.mxu0 0.0
        %2264 = vmatpush2.msra.mxu0 0.0
        %2265 = vmatprep.subr.mxu0 0.0
        %2266 = vmatpush2.msra.mxu0 0.0
        %2267 = vmatprep.subr.mxu0 0.0
        %2268 = vmatpush2.msra.mxu0 0.0
        %2269 = vmatprep.subr.mxu0 0.0
        %2270 = vmatpush2.msra.mxu0 0.0
        %2271 = vmatprep.subr.mxu0 0.0
        %2272 = vmatpush2.msra.mxu0 0.0
        %2273 = vmatprep.subr.mxu0 0.0
        %2274 = vmatpush2.msra.mxu0 0.0
        %2275 = vmatprep.subr.mxu0 0.0
        %2276 = vmatpush2.msra.mxu0 0.0
        %2277 = vmatprep.subr.mxu0 0.0
        %2278 = vmatpush2.msra.mxu0 0.0
        %2279 = vmatprep.subr.mxu0 0.0
        %2280 = vmatpush2.msra.mxu0 0.0
        %2281 = vmatprep.subr.mxu0 0.0
        %2282 = vmatpush2.msra.mxu0 0.0
        %2283 = vmatprep.subr.mxu0 0.0
        %2284 = vmatpush2.msra.mxu0 0.0
        %2285 = vmatprep.subr.mxu0 0.0
        %2286 = vmatpush2.msra.mxu0 0.0
        %2287 = vmatprep.mubr.f32.mxu0 0.0
        %v2288 = vand.u32 %v1043, 4294901760
        %v2289 = vsub.f32 %v1043, %v2288
        %v2290 = vand.u32 %v2289, 4294901760
        %2291 = vmatmul.mubr.f32.gmra.mxu0 %v2290
        %v2292 = vpop.f32.mrf.mxu0
        %v2293 = vadd.f32 %v2169, %v2292
        %v2294 = vpop.f32.mrf.mxu0
        %2295 = vmatprep.mubr.f32.mxu0 0.0
        %v2296 = vand.u32 %v1046, 4294901760
        %v2297 = vsub.f32 %v1046, %v2296
        %v2298 = vand.u32 %v2297, 4294901760
        %2299 = vmatmul.mubr.f32.gmra.mxu0 %v2298
        %v2300 = vpop.f32.mrf.mxu0
        %v2301 = vadd.f32 %v2176, %v2300
        %v2302 = vpop.f32.mrf.mxu0
        %2303 = vmatprep.mubr.f32.mxu0 0.0
        %v2304 = vand.u32 %v1049, 4294901760
        %v2305 = vsub.f32 %v1049, %v2304
        %v2306 = vand.u32 %v2305, 4294901760
        %2307 = vmatmul.mubr.f32.gmra.mxu0 %v2306
        %v2308 = vpop.f32.mrf.mxu0
        %v2309 = vadd.f32 %v2183, %v2308
        %v2310 = vpop.f32.mrf.mxu0
        %2311 = vmatprep.mubr.f32.mxu0 0.0
        %v2312 = vand.u32 %v1052, 4294901760
        %v2313 = vsub.f32 %v1052, %v2312
        %v2314 = vand.u32 %v2313, 4294901760
        %2315 = vmatmul.mubr.f32.gmra.mxu0 %v2314
        %v2316 = vpop.f32.mrf.mxu0
        %v2317 = vadd.f32 %v2190, %v2316
        %v2318 = vpop.f32.mrf.mxu0
        %2319 = vmatprep.mubr.f32.mxu0 0.0
        %v2320 = vand.u32 %v1055, 4294901760
        %v2321 = vsub.f32 %v1055, %v2320
        %v2322 = vand.u32 %v2321, 4294901760
        %2323 = vmatmul.mubr.f32.gmra.mxu0 %v2322
        %v2324 = vpop.f32.mrf.mxu0
        %v2325 = vadd.f32 %v2197, %v2324
        %v2326 = vpop.f32.mrf.mxu0
        %2327 = vmatprep.mubr.f32.mxu0 0.0
        %v2328 = vand.u32 %v1058, 4294901760
        %v2329 = vsub.f32 %v1058, %v2328
        %v2330 = vand.u32 %v2329, 4294901760
        %2331 = vmatmul.mubr.f32.gmra.mxu0 %v2330
        %v2332 = vpop.f32.mrf.mxu0
        %v2333 = vadd.f32 %v2204, %v2332
        %v2334 = vpop.f32.mrf.mxu0
        %2335 = vmatprep.mubr.f32.mxu0 0.0
        %v2336 = vand.u32 %v1061, 4294901760
        %v2337 = vsub.f32 %v1061, %v2336
        %v2338 = vand.u32 %v2337, 4294901760
        %2339 = vmatmul.mubr.f32.gmra.mxu0 %v2338
        %v2340 = vpop.f32.mrf.mxu0
        %v2341 = vadd.f32 %v2211, %v2340
        %v2342 = vpop.f32.mrf.mxu0
        %2343 = vmatprep.mubr.f32.mxu0 0.0
        %v2344 = vand.u32 %v1064, 4294901760
        %v2345 = vsub.f32 %v1064, %v2344
        %v2346 = vand.u32 %v2345, 4294901760
        %2347 = vmatmul.mubr.f32.gmra.mxu0 %v2346
        %v2348 = vpop.f32.mrf.mxu0
        %v2349 = vadd.f32 %v2218, %v2348
        %v2350 = vpop.f32.mrf.mxu0
        %2351 = vdwg.mxu0
        %2352 = vmatprep.subr.mxu0 0.0
        %2353 = vmatpush1.msra.mxu0 0.0
        %2354 = vmatprep.subr.mxu0 0.0
        %2355 = vmatpush1.msra.mxu0 0.0
        %2356 = vmatprep.subr.mxu0 0.0
        %2357 = vmatpush1.msra.mxu0 0.0
        %2358 = vmatprep.subr.mxu0 0.0
        %2359 = vmatpush1.msra.mxu0 0.0
        %2360 = vmatprep.subr.mxu0 0.0
        %2361 = vmatpush1.msra.mxu0 0.0
        %2362 = vmatprep.subr.mxu0 0.0
        %2363 = vmatpush1.msra.mxu0 0.0
        %2364 = vmatprep.subr.mxu0 0.0
        %2365 = vmatpush1.msra.mxu0 0.0
        %2366 = vmatprep.subr.mxu0 0.0
        %2367 = vmatpush1.msra.mxu0 0.0
        %2368 = vmatprep.subr.mxu0 0.0
        %2369 = vmatpush1.msra.mxu0 0.0
        %2370 = vmatprep.subr.mxu0 0.0
        %2371 = vmatpush1.msra.mxu0 0.0
        %2372 = vmatprep.subr.mxu0 0.0
        %2373 = vmatpush1.msra.mxu0 0.0
        %2374 = vmatprep.subr.mxu0 0.0
        %2375 = vmatpush1.msra.mxu0 0.0
        %2376 = vmatprep.subr.mxu0 0.0
        %2377 = vmatpush1.msra.mxu0 0.0
        %2378 = vmatprep.subr.mxu0 0.0
        %2379 = vmatpush1.msra.mxu0 0.0
        %2380 = vmatprep.subr.mxu0 0.0
        %v2381 = vand.u32 %v186, 4294901760
        %v2382 = vsub.f32 %v186, %v2381
        %v2383 = vand.u32 %v2382, 4294901760
        %2384 = vmatpush1.msra.mxu0 %v2383
        %2385 = vmatprep.subr.mxu0 0.0
        %v2386 = vand.u32 %v185, 4294901760
        %v2387 = vsub.f32 %v185, %v2386
        %v2388 = vand.u32 %v2387, 4294901760
        %2389 = vmatpush1.msra.mxu0 %v2388
        %2390 = vmatprep.subr.mxu0 0.0
        %2391 = vmatpush2.msra.mxu0 0.0
        %2392 = vmatprep.subr.mxu0 0.0
        %2393 = vmatpush2.msra.mxu0 0.0
        %2394 = vmatprep.subr.mxu0 0.0
        %2395 = vmatpush2.msra.mxu0 0.0
        %2396 = vmatprep.subr.mxu0 0.0
        %2397 = vmatpush2.msra.mxu0 0.0
        %2398 = vmatprep.subr.mxu0 0.0
        %2399 = vmatpush2.msra.mxu0 0.0
        %2400 = vmatprep.subr.mxu0 0.0
        %2401 = vmatpush2.msra.mxu0 0.0
        %2402 = vmatprep.subr.mxu0 0.0
        %2403 = vmatpush2.msra.mxu0 0.0
        %2404 = vmatprep.subr.mxu0 0.0
        %2405 = vmatpush2.msra.mxu0 0.0
        %2406 = vmatprep.subr.mxu0 0.0
        %2407 = vmatpush2.msra.mxu0 0.0
        %2408 = vmatprep.subr.mxu0 0.0
        %2409 = vmatpush2.msra.mxu0 0.0
        %2410 = vmatprep.subr.mxu0 0.0
        %2411 = vmatpush2.msra.mxu0 0.0
        %2412 = vmatprep.subr.mxu0 0.0
        %2413 = vmatpush2.msra.mxu0 0.0
        %2414 = vmatprep.subr.mxu0 0.0
        %2415 = vmatpush2.msra.mxu0 0.0
        %2416 = vmatprep.subr.mxu0 0.0
        %2417 = vmatpush2.msra.mxu0 0.0
        %2418 = vmatprep.subr.mxu0 0.0
        %2419 = vmatpush2.msra.mxu0 0.0
        %2420 = vmatprep.subr.mxu0 0.0
        %2421 = vmatpush2.msra.mxu0 0.0
        %2422 = vmatprep.mubr.f32.mxu0 0.0
        %v2423 = vand.u32 %v1043, 4294901760
        %2424 = vmatmul.mubr.f32.gmra.mxu0 %v2423
        %v2425 = vpop.f32.mrf.mxu0
        %v2426 = vadd.f32 %v2293, %v2425
        %v2427 = vpop.f32.mrf.mxu0
        %2428 = vmatprep.mubr.f32.mxu0 0.0
        %v2429 = vand.u32 %v1046, 4294901760
        %2430 = vmatmul.mubr.f32.gmra.mxu0 %v2429
        %v2431 = vpop.f32.mrf.mxu0
        %v2432 = vadd.f32 %v2301, %v2431
        %v2433 = vpop.f32.mrf.mxu0
        %2434 = vmatprep.mubr.f32.mxu0 0.0
        %v2435 = vand.u32 %v1049, 4294901760
        %2436 = vmatmul.mubr.f32.gmra.mxu0 %v2435
        %v2437 = vpop.f32.mrf.mxu0
        %v2438 = vadd.f32 %v2309, %v2437
        %v2439 = vpop.f32.mrf.mxu0
        %2440 = vmatprep.mubr.f32.mxu0 0.0
        %v2441 = vand.u32 %v1052, 4294901760
        %2442 = vmatmul.mubr.f32.gmra.mxu0 %v2441
        %v2443 = vpop.f32.mrf.mxu0
        %v2444 = vadd.f32 %v2317, %v2443
        %v2445 = vpop.f32.mrf.mxu0
        %2446 = vmatprep.mubr.f32.mxu0 0.0
        %v2447 = vand.u32 %v1055, 4294901760
        %2448 = vmatmul.mubr.f32.gmra.mxu0 %v2447
        %v2449 = vpop.f32.mrf.mxu0
        %v2450 = vadd.f32 %v2325, %v2449
        %v2451 = vpop.f32.mrf.mxu0
        %2452 = vmatprep.mubr.f32.mxu0 0.0
        %v2453 = vand.u32 %v1058, 4294901760
        %2454 = vmatmul.mubr.f32.gmra.mxu0 %v2453
        %v2455 = vpop.f32.mrf.mxu0
        %v2456 = vadd.f32 %v2333, %v2455
        %v2457 = vpop.f32.mrf.mxu0
        %2458 = vmatprep.mubr.f32.mxu0 0.0
        %v2459 = vand.u32 %v1061, 4294901760
        %2460 = vmatmul.mubr.f32.gmra.mxu0 %v2459
        %v2461 = vpop.f32.mrf.mxu0
        %v2462 = vadd.f32 %v2341, %v2461
        %v2463 = vpop.f32.mrf.mxu0
        %2464 = vmatprep.mubr.f32.mxu0 0.0
        %v2465 = vand.u32 %v1064, 4294901760
        %2466 = vmatmul.mubr.f32.gmra.mxu0 %v2465
        %v2467 = vpop.f32.mrf.mxu0
        %v2468 = vadd.f32 %v2349, %v2467
        %v2469 = vpop.f32.mrf.mxu0
        %2470 = vdwg.mxu0
        %2471 = vmatprep.subr.mxu0 0.0
        %2472 = vmatpush1.msra.mxu0 0.0
        %2473 = vmatprep.subr.mxu0 0.0
        %2474 = vmatpush1.msra.mxu0 0.0
        %2475 = vmatprep.subr.mxu0 0.0
        %2476 = vmatpush1.msra.mxu0 0.0
        %2477 = vmatprep.subr.mxu0 0.0
        %2478 = vmatpush1.msra.mxu0 0.0
        %2479 = vmatprep.subr.mxu0 0.0
        %2480 = vmatpush1.msra.mxu0 0.0
        %2481 = vmatprep.subr.mxu0 0.0
        %2482 = vmatpush1.msra.mxu0 0.0
        %2483 = vmatprep.subr.mxu0 0.0
        %2484 = vmatpush1.msra.mxu0 0.0
        %2485 = vmatprep.subr.mxu0 0.0
        %2486 = vmatpush1.msra.mxu0 0.0
        %2487 = vmatprep.subr.mxu0 0.0
        %2488 = vmatpush1.msra.mxu0 0.0
        %2489 = vmatprep.subr.mxu0 0.0
        %2490 = vmatpush1.msra.mxu0 0.0
        %2491 = vmatprep.subr.mxu0 0.0
        %2492 = vmatpush1.msra.mxu0 0.0
        %2493 = vmatprep.subr.mxu0 0.0
        %2494 = vmatpush1.msra.mxu0 0.0
        %2495 = vmatprep.subr.mxu0 0.0
        %2496 = vmatpush1.msra.mxu0 0.0
        %2497 = vmatprep.subr.mxu0 0.0
        %2498 = vmatpush1.msra.mxu0 0.0
        %2499 = vmatprep.subr.mxu0 0.0
        %v2500 = vand.u32 %v186, 4294901760
        %2501 = vmatpush1.msra.mxu0 %v2500
        %2502 = vmatprep.subr.mxu0 0.0
        %v2503 = vand.u32 %v185, 4294901760
        %2504 = vmatpush1.msra.mxu0 %v2503
        %2505 = vmatprep.subr.mxu0 0.0
        %2506 = vmatpush2.msra.mxu0 0.0
        %2507 = vmatprep.subr.mxu0 0.0
        %2508 = vmatpush2.msra.mxu0 0.0
        %2509 = vmatprep.subr.mxu0 0.0
        %2510 = vmatpush2.msra.mxu0 0.0
        %2511 = vmatprep.subr.mxu0 0.0
        %2512 = vmatpush2.msra.mxu0 0.0
        %2513 = vmatprep.subr.mxu0 0.0
        %2514 = vmatpush2.msra.mxu0 0.0
        %2515 = vmatprep.subr.mxu0 0.0
        %2516 = vmatpush2.msra.mxu0 0.0
        %2517 = vmatprep.subr.mxu0 0.0
        %2518 = vmatpush2.msra.mxu0 0.0
        %2519 = vmatprep.subr.mxu0 0.0
        %2520 = vmatpush2.msra.mxu0 0.0
        %2521 = vmatprep.subr.mxu0 0.0
        %2522 = vmatpush2.msra.mxu0 0.0
        %2523 = vmatprep.subr.mxu0 0.0
        %2524 = vmatpush2.msra.mxu0 0.0
        %2525 = vmatprep.subr.mxu0 0.0
        %2526 = vmatpush2.msra.mxu0 0.0
        %2527 = vmatprep.subr.mxu0 0.0
        %2528 = vmatpush2.msra.mxu0 0.0
        %2529 = vmatprep.subr.mxu0 0.0
        %2530 = vmatpush2.msra.mxu0 0.0
        %2531 = vmatprep.subr.mxu0 0.0
        %2532 = vmatpush2.msra.mxu0 0.0
        %2533 = vmatprep.subr.mxu0 0.0
        %2534 = vmatpush2.msra.mxu0 0.0
        %2535 = vmatprep.subr.mxu0 0.0
        %2536 = vmatpush2.msra.mxu0 0.0
        %2537 = vmatprep.mubr.f32.mxu0 0.0
        %v2538 = vand.u32 %v1043, 4294901760
        %2539 = vmatmul.mubr.f32.gmra.mxu0 %v2538
        %v2540 = vpop.f32.mrf.mxu0
        %v2541 = vadd.f32 %v2426, %v2540
        %v2542 = vpop.f32.mrf.mxu0
        %2543 = vmatprep.mubr.f32.mxu0 0.0
        %v2544 = vand.u32 %v1046, 4294901760
        %2545 = vmatmul.mubr.f32.gmra.mxu0 %v2544
        %v2546 = vpop.f32.mrf.mxu0
        %v2547 = vadd.f32 %v2432, %v2546
        %v2548 = vpop.f32.mrf.mxu0
        %2549 = vmatprep.mubr.f32.mxu0 0.0
        %v2550 = vand.u32 %v1049, 4294901760
        %2551 = vmatmul.mubr.f32.gmra.mxu0 %v2550
        %v2552 = vpop.f32.mrf.mxu0
        %v2553 = vadd.f32 %v2438, %v2552
        %v2554 = vpop.f32.mrf.mxu0
        %2555 = vmatprep.mubr.f32.mxu0 0.0
        %v2556 = vand.u32 %v1052, 4294901760
        %2557 = vmatmul.mubr.f32.gmra.mxu0 %v2556
        %v2558 = vpop.f32.mrf.mxu0
        %v2559 = vadd.f32 %v2444, %v2558
        %v2560 = vpop.f32.mrf.mxu0
        %2561 = vmatprep.mubr.f32.mxu0 0.0
        %v2562 = vand.u32 %v1055, 4294901760
        %2563 = vmatmul.mubr.f32.gmra.mxu0 %v2562
        %v2564 = vpop.f32.mrf.mxu0
        %v2565 = vadd.f32 %v2450, %v2564
        %v2566 = vpop.f32.mrf.mxu0
        %2567 = vmatprep.mubr.f32.mxu0 0.0
        %v2568 = vand.u32 %v1058, 4294901760
        %2569 = vmatmul.mubr.f32.gmra.mxu0 %v2568
        %v2570 = vpop.f32.mrf.mxu0
        %v2571 = vadd.f32 %v2456, %v2570
        %v2572 = vpop.f32.mrf.mxu0
        %2573 = vmatprep.mubr.f32.mxu0 0.0
        %v2574 = vand.u32 %v1061, 4294901760
        %2575 = vmatmul.mubr.f32.gmra.mxu0 %v2574
        %v2576 = vpop.f32.mrf.mxu0
        %v2577 = vadd.f32 %v2462, %v2576
        %v2578 = vpop.f32.mrf.mxu0
        %2579 = vmatprep.mubr.f32.mxu0 0.0
        %v2580 = vand.u32 %v1064, 4294901760
        %2581 = vmatmul.mubr.f32.gmra.mxu0 %v2580
        %v2582 = vpop.f32.mrf.mxu0
        %v2583 = vadd.f32 %v2468, %v2582
        %v2584 = vpop.f32.mrf.mxu0
        %2585 = vdwg.mxu0
        %v2586 = vrot.slane %v1781, 7
        %v2587 = vrot.slane %v1793, 7
        %v2588 = vrot.slane %v1805, 7
        %v2589 = vrot.slane %v1817, 7
        %v2590 = vrot.slane %v1787, 7
        %v2591 = vrot.slane %v1799, 7
        %v2592 = vrot.slane %v1811, 7
        %v2593 = vrot.slane %v1823, 7
        %v2594 = vsel %vm968, %v2586, %v2590
        %v2595 = vsel %vm968, %v2587, %v2591
        %v2596 = vsel %vm968, %v2588, %v2592
        %v2597 = vsel %vm968, %v2589, %v2593
        %v2598 = vsel %vm968, %v2590, %v2586
        %v2599 = vsel %vm968, %v2591, %v2587
        %v2600 = vsel %vm968, %v2592, %v2588
        %v2601 = vsel %vm968, %v2593, %v2589
        %v2602 = vsel %vm979, %v2598, 0.0
        %v2603 = vsel %vm980, %v2594, 0.0
        %v2604 = vsel %vm979, %v2599, 0.0
        %v2605 = vsel %vm980, %v2595, 0.0
        %v2606 = vsel %vm979, %v2600, 0.0
        %v2607 = vsel %vm980, %v2596, 0.0
        %v2608 = vsel %vm979, %v2601, 0.0
        %v2609 = vsel %vm980, %v2597, 0.0
        %v2610 = vmul.f32 %v1781, 2.0
        %v2611 = vmul.f32 %v1787, 2.0
        %v2612 = vmul.f32 %v1793, 2.0
        %v2613 = vmul.f32 %v1799, 2.0
        %v2614 = vmul.f32 %v1805, 2.0
        %v2615 = vmul.f32 %v1811, 2.0
        %v2616 = vmul.f32 %v1817, 2.0
        %v2617 = vmul.f32 %v1823, 2.0
        %v2618 = vadd.f32 %v2602, %v2610
        %v2619 = vadd.f32 %v2603, %v2611
        %v2620 = vadd.f32 %v2604, %v2612
        %v2621 = vadd.f32 %v2605, %v2613
        %v2622 = vadd.f32 %v2606, %v2614
        %v2623 = vadd.f32 %v2607, %v2615
        %v2624 = vadd.f32 %v2608, %v2616
        %v2625 = vadd.f32 %v2609, %v2617
        %v2626 = vrot.slane %v1781, 1
        %v2627 = vrot.slane %v1793, 1
        %v2628 = vrot.slane %v1805, 1
        %v2629 = vrot.slane %v1817, 1
        %v2630 = vrot.slane %v1787, 1
        %v2631 = vrot.slane %v1799, 1
        %v2632 = vrot.slane %v1811, 1
        %v2633 = vrot.slane %v1823, 1
        %v2634 = vsel %vm1005, %v2626, %v2630
        %v2635 = vsel %vm1005, %v2627, %v2631
        %v2636 = vsel %vm1005, %v2628, %v2632
        %v2637 = vsel %vm1005, %v2629, %v2633
        %v2638 = vsel %vm1005, %v2630, %v2626
        %v2639 = vsel %vm1005, %v2631, %v2627
        %v2640 = vsel %vm1005, %v2632, %v2628
        %v2641 = vsel %vm1005, %v2633, %v2629
        %v2642 = vsel %vm1016, %v2634, 0.0
        %v2643 = vsel %vm1017, %v2638, 0.0
        %v2644 = vsel %vm1016, %v2635, 0.0
        %v2645 = vsel %vm1017, %v2639, 0.0
        %v2646 = vsel %vm1016, %v2636, 0.0
        %v2647 = vsel %vm1017, %v2640, 0.0
        %v2648 = vsel %vm1016, %v2637, 0.0
        %v2649 = vsel %vm1017, %v2641, 0.0
        %v2650 = vadd.f32 %v2618, %v2642
        %v2651 = vadd.f32 %v2619, %v2643
        %v2652 = vadd.f32 %v2620, %v2644
        %v2653 = vadd.f32 %v2621, %v2645
        %v2654 = vadd.f32 %v2622, %v2646
        %v2655 = vadd.f32 %v2623, %v2647
        %v2656 = vadd.f32 %v2624, %v2648
        %v2657 = vadd.f32 %v2625, %v2649
        %v2658 = vmul.f32 %v2650, 0.25
        %v2659 = vmul.f32 %v2651, 0.25
        %v2660 = vmul.f32 %v2652, 0.25
        %v2661 = vmul.f32 %v2653, 0.25
        %v2662 = vmul.f32 %v2654, 0.25
        %v2663 = vmul.f32 %v2655, 0.25
        %v2664 = vmul.f32 %v2656, 0.25
        %v2665 = vmul.f32 %v2657, 0.25
        %v2666 = vrot.slane %v2541, 7
        %v2667 = vrot.slane %v2553, 7
        %v2668 = vrot.slane %v2565, 7
        %v2669 = vrot.slane %v2577, 7
        %v2670 = vrot.slane %v2547, 7
        %v2671 = vrot.slane %v2559, 7
        %v2672 = vrot.slane %v2571, 7
        %v2673 = vrot.slane %v2583, 7
        %v2674 = vsel %vm968, %v2666, %v2670
        %v2675 = vsel %vm968, %v2667, %v2671
        %v2676 = vsel %vm968, %v2668, %v2672
        %v2677 = vsel %vm968, %v2669, %v2673
        %v2678 = vsel %vm968, %v2670, %v2666
        %v2679 = vsel %vm968, %v2671, %v2667
        %v2680 = vsel %vm968, %v2672, %v2668
        %v2681 = vsel %vm968, %v2673, %v2669
        %v2682 = vsel %vm979, %v2678, 0.0
        %v2683 = vsel %vm980, %v2674, 0.0
        %v2684 = vsel %vm979, %v2679, 0.0
        %v2685 = vsel %vm980, %v2675, 0.0
        %v2686 = vsel %vm979, %v2680, 0.0
        %v2687 = vsel %vm980, %v2676, 0.0
        %v2688 = vsel %vm979, %v2681, 0.0
        %v2689 = vsel %vm980, %v2677, 0.0
        %v2690 = vrot.slane %v2541, 1
        %v2691 = vrot.slane %v2553, 1
        %v2692 = vrot.slane %v2565, 1
        %v2693 = vrot.slane %v2577, 1
        %v2694 = vrot.slane %v2547, 1
        %v2695 = vrot.slane %v2559, 1
        %v2696 = vrot.slane %v2571, 1
        %v2697 = vrot.slane %v2583, 1
        %v2698 = vsel %vm1005, %v2690, %v2694
        %v2699 = vsel %vm1005, %v2691, %v2695
        %v2700 = vsel %vm1005, %v2692, %v2696
        %v2701 = vsel %vm1005, %v2693, %v2697
        %v2702 = vsel %vm1005, %v2694, %v2690
        %v2703 = vsel %vm1005, %v2695, %v2691
        %v2704 = vsel %vm1005, %v2696, %v2692
        %v2705 = vsel %vm1005, %v2697, %v2693
        %v2706 = vsel %vm1016, %v2698, 0.0
        %v2707 = vsel %vm1017, %v2702, 0.0
        %v2708 = vsel %vm1016, %v2699, 0.0
        %v2709 = vsel %vm1017, %v2703, 0.0
        %v2710 = vsel %vm1016, %v2700, 0.0
        %v2711 = vsel %vm1017, %v2704, 0.0
        %v2712 = vsel %vm1016, %v2701, 0.0
        %v2713 = vsel %vm1017, %v2705, 0.0
        %v2714 = vsub.f32 %v2682, %v2706
        %v2715 = vsub.f32 %v2683, %v2707
        %v2716 = vsub.f32 %v2684, %v2708
        %v2717 = vsub.f32 %v2685, %v2709
        %v2718 = vsub.f32 %v2686, %v2710
        %v2719 = vsub.f32 %v2687, %v2711
        %v2720 = vsub.f32 %v2688, %v2712
        %v2721 = vsub.f32 %v2689, %v2713
        %v2722 = vmul.f32 %v2714, 0.25
        %v2723 = vmul.f32 %v2715, 0.25
        %v2724 = vmul.f32 %v2716, 0.25
        %v2725 = vmul.f32 %v2717, 0.25
        %v2726 = vmul.f32 %v2718, 0.25
        %v2727 = vmul.f32 %v2719, 0.25
        %v2728 = vmul.f32 %v2720, 0.25
        %v2729 = vmul.f32 %v2721, 0.25
        %v2730 = vmul.f32 %v2658, %v2658
        %v2731 = vmul.f32 %v2659, %v2659
        %v2732 = vmul.f32 %v2660, %v2660
        %v2733 = vmul.f32 %v2661, %v2661
        %v2734 = vmul.f32 %v2662, %v2662
        %v2735 = vmul.f32 %v2663, %v2663
        %v2736 = vmul.f32 %v2664, %v2664
        %v2737 = vmul.f32 %v2665, %v2665
        %v2738 = vmul.f32 %v2722, %v2722
        %v2739 = vmul.f32 %v2723, %v2723
        %v2740 = vmul.f32 %v2724, %v2724
        %v2741 = vmul.f32 %v2725, %v2725
        %v2742 = vmul.f32 %v2726, %v2726
        %v2743 = vmul.f32 %v2727, %v2727
        %v2744 = vmul.f32 %v2728, %v2728
        %v2745 = vmul.f32 %v2729, %v2729
        %v2746 = vadd.f32 %v2730, %v2738
        %v2747 = vadd.f32 %v2731, %v2739
        %v2748 = vadd.f32 %v2732, %v2740
        %v2749 = vadd.f32 %v2733, %v2741
        %v2750 = vadd.f32 %v2734, %v2742
        %v2751 = vadd.f32 %v2735, %v2743
        %v2752 = vadd.f32 %v2736, %v2744
        %v2753 = vadd.f32 %v2737, %v2745
        %v2754 = vadd.f32 %v2746, 0.0001
        %v2755 = vadd.f32 %v2747, 0.0001
        %v2756 = vadd.f32 %v2748, 0.0001
        %v2757 = vadd.f32 %v2749, 0.0001
        %v2758 = vadd.f32 %v2750, 0.0001
        %v2759 = vadd.f32 %v2751, 0.0001
        %v2760 = vadd.f32 %v2752, 0.0001
        %v2761 = vadd.f32 %v2753, 0.0001
        %v2762 = vrsqrt.pop %v2754
        %v2763 = vmul.f32 %v2754, %v2762
        %vm2764 = vcmp.eq.f32.partialorder %v2754, inf
        %v2765 = vsel %vm2764, %v2754, %v2763
        %vm2766 = vcmp.eq.f32.partialorder %v2754, 0.0
        %v2767 = vand.u32 %v2754, 2147483648
        %v2768 = vsel %vm2766, %v2767, %v2765
        %v2769 = vrsqrt.pop %v2755
        %v2770 = vmul.f32 %v2755, %v2769
        %vm2771 = vcmp.eq.f32.partialorder %v2755, inf
        %v2772 = vsel %vm2771, %v2755, %v2770
        %vm2773 = vcmp.eq.f32.partialorder %v2755, 0.0
        %v2774 = vand.u32 %v2755, 2147483648
        %v2775 = vsel %vm2773, %v2774, %v2772
        %v2776 = vrsqrt.pop %v2756
        %v2777 = vmul.f32 %v2756, %v2776
        %vm2778 = vcmp.eq.f32.partialorder %v2756, inf
        %v2779 = vsel %vm2778, %v2756, %v2777
        %vm2780 = vcmp.eq.f32.partialorder %v2756, 0.0
        %v2781 = vand.u32 %v2756, 2147483648
        %v2782 = vsel %vm2780, %v2781, %v2779
        %v2783 = vrsqrt.pop %v2757
        %v2784 = vmul.f32 %v2757, %v2783
        %vm2785 = vcmp.eq.f32.partialorder %v2757, inf
        %v2786 = vsel %vm2785, %v2757, %v2784
        %vm2787 = vcmp.eq.f32.partialorder %v2757, 0.0
        %v2788 = vand.u32 %v2757, 2147483648
        %v2789 = vsel %vm2787, %v2788, %v2786
        %v2790 = vrsqrt.pop %v2758
        %v2791 = vmul.f32 %v2758, %v2790
        %vm2792 = vcmp.eq.f32.partialorder %v2758, inf
        %v2793 = vsel %vm2792, %v2758, %v2791
        %vm2794 = vcmp.eq.f32.partialorder %v2758, 0.0
        %v2795 = vand.u32 %v2758, 2147483648
        %v2796 = vsel %vm2794, %v2795, %v2793
        %v2797 = vrsqrt.pop %v2759
        %v2798 = vmul.f32 %v2759, %v2797
        %vm2799 = vcmp.eq.f32.partialorder %v2759, inf
        %v2800 = vsel %vm2799, %v2759, %v2798
        %vm2801 = vcmp.eq.f32.partialorder %v2759, 0.0
        %v2802 = vand.u32 %v2759, 2147483648
        %v2803 = vsel %vm2801, %v2802, %v2800
        %v2804 = vrsqrt.pop %v2760
        %v2805 = vmul.f32 %v2760, %v2804
        %vm2806 = vcmp.eq.f32.partialorder %v2760, inf
        %v2807 = vsel %vm2806, %v2760, %v2805
        %vm2808 = vcmp.eq.f32.partialorder %v2760, 0.0
        %v2809 = vand.u32 %v2760, 2147483648
        %v2810 = vsel %vm2808, %v2809, %v2807
        %v2811 = vrsqrt.pop %v2761
        %v2812 = vmul.f32 %v2761, %v2811
        %vm2813 = vcmp.eq.f32.partialorder %v2761, inf
        %v2814 = vsel %vm2813, %v2761, %v2812
        %vm2815 = vcmp.eq.f32.partialorder %v2761, 0.0
        %v2816 = vand.u32 %v2761, 2147483648
        %v2817 = vsel %vm2815, %v2816, %v2814
        %2818 = vst.msk [vmem:[%s135] sm:$0xff] %vm187, %v2768
        %2819 = vst.msk [vmem:[%s135 + $0x8] sm:$0xff] %vm187, %v2775
        %2820 = vst.msk [vmem:[%s135 + $0x10] sm:$0xff] %vm187, %v2782
        %2821 = vst.msk [vmem:[%s135 + $0x18] sm:$0xff] %vm187, %v2789
        %2822 = vst.msk [vmem:[%s135 + $0x20] sm:$0xff] %vm187, %v2796
        %2823 = vst.msk [vmem:[%s135 + $0x28] sm:$0xff] %vm187, %v2803
        %2824 = vst.msk [vmem:[%s135 + $0x30] sm:$0xff] %vm187, %v2810
        %2825 = vst.msk [vmem:[%s135 + $0x38] sm:$0xff] %vm187, %v2817
        %s2826 = sand.u32 %s52, 1
        %s2827 = scalar_lea.sflag [#allocation4], %s2826
        %s2828 = sand.u32 %s52, 1
        %s2829 = smul.addr %s2828, 64
        %s2830 = scalar_lea.vmem [#allocation5], %s2829
        // Predicated region
        $region29: #{tpu_custom_call.1} parent=23 // pred_check
          %p2831 = pneg %p62
        $region30: #{tpu_custom_call.1} parent=23 // pred_check_branch
          %2833 = sbr.rel (%p2831) target = $region32
        $region31: #{tpu_custom_call.1} parent=23 // pred_region
          %s2834 = smul.u32 4, %s18
          %s2836 = ssub.s32 1024, 1024
          %2837 = vsyncadd %s2827, %s2836
          %s2838 = smul.addr %s2834, 2
          %s2839 = smul.addr %s2838, 128
          %s2840 = scalar_lea.hbm %s1, %s2839
          %s2841 = sshll.u32 %s2830, 4
          %s2842 = int_to_ptr.vmem [resolvable:$true] %s2841
          %2847 = dma.vmem_to_hbm [thread:$0]  %s2842, 1024, %s2840, %s2827, 128, 128, 8
        $region32: #{tpu_custom_call.1} parent=23 // pred_fallthru
          _
      $region24: #{tpu_custom_call.1} parent=5 // pred_fallthru
        _
      %p2848 = scmp.le.s32.totalorder 2, %s13
      // Predicated region
      $region33: #{tpu_custom_call.1} parent=5 // pred_check
        %p2849 = pneg %p2848
      $region34: #{tpu_custom_call.1} parent=5 // pred_check_branch
        %2851 = sbr.rel (%p2849) target = $region36
      $region35: #{tpu_custom_call.1} parent=5 // pred_region
        %s2852 = ssub.s32 %s13, 2
        // Predicated region
        $region37: #{tpu_custom_call.1} parent=35 // pred_check
          %p2853 = pneg %p68
        $region38: #{tpu_custom_call.1} parent=35 // pred_check_branch
          %2855 = sbr.rel (%p2853) target = $region40
        $region39: #{tpu_custom_call.1} parent=35 // pred_region
          %s2856 = sand.u32 %s53, 1
          %s2857 = scalar_lea.sflag [#allocation4], %s2856
          %s2858 = sand.u32 %s53, 1
          %s2859 = smul.addr %s2858, 64
          %s2860 = scalar_lea.vmem [#allocation5], %s2859
          %2861 = dma.done %s2857, 1024
        $region40: #{tpu_custom_call.1} parent=35 // pred_fallthru
          _
      $region36: #{tpu_custom_call.1} parent=5 // pred_fallthru
        _
    $region6: #{tpu_custom_call.1} parent=1 // loop_footer
      %s17 = sadd.s32 1, %s13
    $region7: #{tpu_custom_call.1} parent=1 // loop_footer_branch
      %12 = sbr.rel target = $region3
    $region8: #{tpu_custom_call.1} parent=1 // loop_exit
      _
    %2862 = vsyncpa [#allocation3], 1
    %s2863 = scalar_lea.sflag [#allocation3], 1
    %2864 = vsyncpa %s2863, 1
    %2865 = vsyncpa [#allocation4], 1
    %s2866 = scalar_lea.sflag [#allocation4], 1
    %2867 = vsyncpa %s2866, 1

</llo_original>
